<compile_context>
chip_gen: v5e
topology: v5e:2x2
jax: 0.10.0
libtpu: 0.0.40
codegen_flags: <defaults>
</compile_context>

<pallas_src>
import numpy as np
import jax
import jax.numpy as jnp
from jax.experimental import pallas as pl
from jax.experimental.pallas import tpu as pltpu


def _lstm_recurrent_kernel(len_ref, gx_ref, whh_ref, out_ref, hn_ref, cn_ref,
                           h_scr, c_scr):
    """One time-chunk of the LSTM recurrence.

    len_ref : (Bp, 1)   int32  per-row sequence length (padded rows = 0)
    gx_ref  : (Tc, Bp, 4Hp) bf16  x@W_ih^T + bias for this chunk (time-major,
              gate order [i,f,o,g]; sigmoid-gate columns pre-scaled by 0.5)
    whh_ref : (Hp, 4Hp) bf16   W_hh^T (same ordering / scaling)
    out_ref : (Bp, Tc, Hp) f32 batch-major hidden states for this chunk
    hn_ref, cn_ref : (Bp, Hp) f32 final state (valid after the last chunk)
    h_scr, c_scr   : (Bp, Hp) f32 VMEM scratch carrying state across chunks
    """
    Tc = gx_ref.shape[0]
    Bp, Hp = hn_ref.shape

    @pl.when(pl.program_id(0) == 0)
    def _():
        h_scr[...] = jnp.zeros_like(h_scr)
        c_scr[...] = jnp.zeros_like(c_scr)

    lens = len_ref[...]                       # (Bp, 1), loaded once per chunk
    t0 = pl.program_id(0) * Tc                # global time offset of this chunk

    h = h_scr[...]
    c = c_scr[...]

    # Static unroll over the (small) chunk; the chunked grid bounds code size
    # and vreg live ranges.  W_hh^T is read from its ref inside the loop (not
    # hoisted to a pre-loop value) so regalloc does not pin it across the body.
    for t in range(Tc):
        gates = jnp.dot(h.astype(jnp.bfloat16), whh_ref[...],
                        preferred_element_type=jnp.float32) + gx_ref[t]
        # Gate order [i, f, o, g]; i/f/o pre-activations were pre-scaled by 0.5
        # so a single wide tanh gives sigmoid(z) = 0.5*tanh(z/2) + 0.5.
        act = jnp.tanh(gates)                              # one EUP pass, (Bp, 4Hp)
        i_g = act[:, 0 * Hp:1 * Hp] * 0.5 + 0.5
        f_g = act[:, 1 * Hp:2 * Hp] * 0.5 + 0.5
        o_g = act[:, 2 * Hp:3 * Hp] * 0.5 + 0.5
        g_g = act[:, 3 * Hp:4 * Hp]

        c_new = f_g * c + i_g * g_g
        h_new = o_g * jnp.tanh(c_new)

        valid = lens > (t0 + t)                            # (Bp,1) broadcasts over Hp
        h = jnp.where(valid, h_new, h)                     # freeze past sequence end
        c = jnp.where(valid, c_new, c)
        out_ref[:, t:t + 1, :] = jnp.where(valid, h_new, 0.0)[:, None, :]

    h_scr[...] = h
    c_scr[...] = c
    hn_ref[...] = h                                        # cheap (Bp,Hp) store per chunk;
    cn_ref[...] = c                                        # final chunk's value is written back


def _pack_gates_ifog(w, H, Hp):
    """Reorder PyTorch LSTM gate blocks [i,f,g,o] -> [i,f,o,g], zero-pad each
    block's gate dim from H to Hp (lane alignment), and pre-scale the sigmoid
    gates (i,f,o) by 0.5 so sigmoid(z) = 0.5*tanh(0.5*z)+0.5 needs one tanh."""
    i_b, f_b, g_b, o_b = (w[k * H:(k + 1) * H] for k in range(4))
    blocks = (0.5 * i_b, 0.5 * f_b, 0.5 * o_b, g_b)
    pad = ((0, Hp - H),) + ((0, 0),) * (w.ndim - 1)
    return jnp.concatenate([jnp.pad(b, pad) for b in blocks], axis=0)


def text_lstm_forward(inputs, length, w_ih, w_hh, b_ih, b_hh,
                      max_length=None, chunk_steps=16):
    """inputs: [B, T, D] f32 (batch_first), length: [B] int.
    w_ih: [4H, D], w_hh: [4H, H], b_ih/b_hh: [4H]  (PyTorch layout, gates i,f,g,o).
    max_length: static Python int (= max(length)) or None for full T.
    Returns (output [B, Tmax, H], (hn [1, B, H], cn [1, B, H]))."""
    B, T, D = inputs.shape
    H = w_ih.shape[0] // 4
    f32, bf16 = jnp.float32, jnp.bfloat16

    Bp = ((B + 7) // 8) * 8                     # sublane-aligned batch
    Hp = ((H + 127) // 128) * 128               # lane-aligned hidden (whole vregs, unmasked stores)
    G = 4 * Hp

    t_max = T if max_length is None else int(max_length)       # static -> no host sync
    Tc = min(int(chunk_steps), ((t_max + 7) // 8) * 8)          # chunk length, multiple of 8
    T_pad = ((t_max + Tc - 1) // Tc) * Tc                       # rounded-up run length
    n_chunks = T_pad // Tc

    # ---- one-time weight prep: reorder / pad / pre-scale gates ----
    w_ih_p = _pack_gates_ifog(w_ih.astype(f32), H, Hp)                    # (G, D)
    bias_p = _pack_gates_ifog((b_ih + b_hh).astype(f32), H, Hp)           # (G,)
    w_hh_p = _pack_gates_ifog(w_hh.astype(f32), H, Hp)                    # (G, H)
    whh_t = jnp.pad(w_hh_p, ((0, 0), (0, Hp - H))).T.astype(bf16)         # (Hp, G) bf16

    # ---- hoisted bulk GEMM: gates_x, time-major, bf16 in HBM ----
    x_tm = jnp.transpose(inputs[:, :t_max, :].astype(f32), (1, 0, 2))     # (t_max, B, D) (small transpose)
    gx = jnp.einsum('tbd,gd->tbg', x_tm, w_ih_p) + bias_p                 # (t_max, B, G) f32
    gx = jnp.pad(gx, ((0, T_pad - t_max), (0, Bp - B), (0, 0))).astype(bf16)

    len_col = jnp.pad(length.astype(jnp.int32).reshape(B, 1),
                      ((0, Bp - B), (0, 0)))                              # padded rows: length 0

    out_bm, hn, cn = pl.pallas_call(
        _lstm_recurrent_kernel,
        out_shape=(
            jax.ShapeDtypeStruct((Bp, T_pad, Hp), f32),     # batch-major hidden states
            jax.ShapeDtypeStruct((Bp, Hp), f32),            # hn
            jax.ShapeDtypeStruct((Bp, Hp), f32),            # cn
        ),
        grid_spec=pltpu.PrefetchScalarGridSpec(
            num_scalar_prefetch=0,
            grid=(n_chunks,),                               # streamed time chunks (serial carry)
            in_specs=[
                pl.BlockSpec((Bp, 1), lambda i: (0, 0)),            # lengths (resident)
                pl.BlockSpec((Tc, Bp, G), lambda i: (i, 0, 0)),     # gates_x chunk (double-buffered)
                pl.BlockSpec((Hp, G), lambda i: (0, 0)),            # W_hh^T (resident)
            ],
            out_specs=[
                pl.BlockSpec((Bp, Tc, Hp), lambda i: (0, i, 0)),    # out chunk (writeback overlaps)
                pl.BlockSpec((Bp, Hp), lambda i: (0, 0)),           # hn
                pl.BlockSpec((Bp, Hp), lambda i: (0, 0)),           # cn
            ],
            scratch_shapes=[
                pltpu.VMEM((Bp, Hp), f32),                  # carried h
                pltpu.VMEM((Bp, Hp), f32),                  # carried c
            ],
        ),
        compiler_params=pltpu.CompilerParams(
            dimension_semantics=("arbitrary",),             # recurrence is serial through scratch
            vmem_limit_bytes=48 * 1024 * 1024,              # explicit budget; fits v7x's 64 MiB
        ),
    )(len_col, gx, whh_t)

    output = out_bm[:B, :t_max, :H]                         # already batch-major: slice only
    return output, (hn[None, :B, :H], cn[None, :B, :H])


def _lstm_reference(inputs, length, w_ih, w_hh, b_ih, b_hh):
    """Pure-JAX f32 reference replicating the packed-LSTM semantics."""
    B, T, D = inputs.shape
    H = w_ih.shape[0] // 4
    h = jnp.zeros((B, H), jnp.float32)
    c = jnp.zeros((B, H), jnp.float32)
    outs = []
    for t in range(T):
        x_t = inputs[:, t, :]
        gates = x_t @ w_ih.T + h @ w_hh.T + b_ih + b_hh
        i_g = jax.nn.sigmoid(gates[:, 0 * H:1 * H])
        f_g = jax.nn.sigmoid(gates[:, 1 * H:2 * H])
        g_g = jnp.tanh(gates[:, 2 * H:3 * H])
        o_g = jax.nn.sigmoid(gates[:, 3 * H:4 * H])
        c_new = f_g * c + i_g * g_g
        h_new = o_g * jnp.tanh(c_new)
        valid = (length > t)[:, None]
        h = jnp.where(valid, h_new, h)
        c = jnp.where(valid, c_new, c)
        outs.append(jnp.where(valid, h_new, 0.0))
    out = jnp.stack(outs, axis=1)[:, :int(np.max(np.asarray(length))), :]
    return out, h, c


if __name__ == "__main__":
    B, T, D, H = 4, 8, 16, 32

    key = jax.random.PRNGKey(0)
    k_x, k_wi, k_wh, k_bi, k_bh = jax.random.split(key, 5)

    inputs = jax.random.normal(k_x, (B, T, D), dtype=jnp.float32)
    lengths_host = np.array([8, 5, 3, 6], dtype=np.int32)     # variable sequence lengths
    length = jnp.asarray(lengths_host)
    t_max = int(lengths_host.max())                           # host-side, no device sync

    bound = 1.0 / np.sqrt(H)   # PyTorch default LSTM init range
    w_ih = jax.random.uniform(k_wi, (4 * H, D), minval=-bound, maxval=bound, dtype=jnp.float32)
    w_hh = jax.random.uniform(k_wh, (4 * H, H), minval=-bound, maxval=bound, dtype=jnp.float32)
    b_ih = jax.random.uniform(k_bi, (4 * H,), minval=-bound, maxval=bound, dtype=jnp.float32)
    b_hh = jax.random.uniform(k_bh, (4 * H,), minval=-bound, maxval=bound, dtype=jnp.float32)

    fwd = jax.jit(text_lstm_forward, static_argnames=("max_length", "chunk_steps"))
    output, (hn, cn) = fwd(inputs, length, w_ih, w_hh, b_ih, b_hh, max_length=t_max)
    jax.block_until_ready((output, hn, cn))

    out_ref, h_ref, c_ref = _lstm_reference(inputs, length, w_ih, w_hh, b_ih, b_hh)
    assert output.shape == (B, t_max, H)
    assert hn.shape == (1, B, H) and cn.shape == (1, B, H)
    # bf16 gates_x storage + bf16 MXU operands -> relaxed tolerances vs f32 reference.
    np.testing.assert_allclose(np.asarray(output), np.asarray(out_ref), rtol=5e-2, atol=2e-2)
    np.testing.assert_allclose(np.asarray(hn[0]), np.asarray(h_ref), rtol=5e-2, atol=2e-2)
    np.testing.assert_allclose(np.asarray(cn[0]), np.asarray(c_ref), rtol=5e-2, atol=2e-2)

    print("KERNEL_OK")
</pallas_src>

<mosaic_0001>
module attributes {stable_mosaic.version = 11 : i64} {
  func.func @_lstm_recurrent_kernel(%arg0: i32, %arg1: memref<8x1xi32, #tpu.memory_space<vmem>>, %arg2: memref<8x8x512xbf16, #tpu.memory_space<vmem>>, %arg3: memref<128x512xbf16, #tpu.memory_space<vmem>>, %arg4: memref<8x8x128xf32, #tpu.memory_space<vmem>>, %arg5: memref<8x128xf32, #tpu.memory_space<vmem>>, %arg6: memref<8x128xf32, #tpu.memory_space<vmem>>, %arg7: memref<8x128xf32, #tpu.memory_space<vmem>>, %arg8: memref<8x128xf32, #tpu.memory_space<vmem>>) attributes {dimension_semantics = [#tpu.dimension_semantics<arbitrary>], iteration_bounds = array<i64: 1>, scalar_prefetch = 0 : i64, scratch_operands = 2 : i64, tpu.core_type = #tpu.core_type<tc>, window_params = [{pipeline_mode = #tpu.pipeline_mode<synchronous>, transform_indices = @transform_0, window_bounds = array<i64: 8, 1>}, {transform_indices = @transform_1, window_bounds = array<i64: 8, 8, 512>}, {pipeline_mode = #tpu.pipeline_mode<synchronous>, transform_indices = @transform_2, window_bounds = array<i64: 128, 512>}, {transform_indices = @transform_3, window_bounds = array<i64: 8, 8, 128>}, {pipeline_mode = #tpu.pipeline_mode<synchronous>, transform_indices = @transform_4, window_bounds = array<i64: 8, 128>}, {pipeline_mode = #tpu.pipeline_mode<synchronous>, transform_indices = @transform_5, window_bounds = array<i64: 8, 128>}]} {
    %c0_i32 = arith.constant 0 : i32
    %0 = arith.cmpi eq, %arg0, %c0_i32 : i32
    %1 = arith.extui %0 : i1 to i32
    %c0_i32_0 = arith.constant 0 : i32
    %2 = arith.cmpi ne, %1, %c0_i32_0 : i32
    scf.if %2 {
      %cst_135 = arith.constant 0.000000e+00 : f32
      %363 = vector.broadcast %cst_135 : f32 to vector<8x128xf32>
      %c0_136 = arith.constant 0 : index
      %c0_137 = arith.constant 0 : index
      %364 = vector.load %arg7[%c0_136, %c0_137] : memref<8x128xf32, #tpu.memory_space<vmem>>, vector<8x128xf32>
      tpu.vector_store %arg7[%c0_136, %c0_137], %363 {strides = array<i32>} : memref<8x128xf32, #tpu.memory_space<vmem>>, vector<8x128xf32>,
      %cst_138 = arith.constant 0.000000e+00 : f32
      %365 = vector.broadcast %cst_138 : f32 to vector<8x128xf32>
      %c0_139 = arith.constant 0 : index
      %c0_140 = arith.constant 0 : index
      %366 = vector.load %arg8[%c0_139, %c0_140] : memref<8x128xf32, #tpu.memory_space<vmem>>, vector<8x128xf32>
      tpu.vector_store %arg8[%c0_139, %c0_140], %365 {strides = array<i32>} : memref<8x128xf32, #tpu.memory_space<vmem>>, vector<8x128xf32>,
    } else {
    }
    %c0 = arith.constant 0 : index
    %c0_1 = arith.constant 0 : index
    %3 = vector.load %arg1[%c0, %c0_1] : memref<8x1xi32, #tpu.memory_space<vmem>>, vector<8x1xi32>
    %c8_i32 = arith.constant 8 : i32
    %4 = arith.muli %arg0, %c8_i32 : i32
    %c0_2 = arith.constant 0 : index
    %c0_3 = arith.constant 0 : index
    %5 = vector.load %arg7[%c0_2, %c0_3] : memref<8x128xf32, #tpu.memory_space<vmem>>, vector<8x128xf32>
    %c0_4 = arith.constant 0 : index
    %c0_5 = arith.constant 0 : index
    %6 = vector.load %arg8[%c0_4, %c0_5] : memref<8x128xf32, #tpu.memory_space<vmem>>, vector<8x128xf32>
    %7 = arith.truncf %5 : vector<8x128xf32> to vector<8x128xbf16>
    %c0_6 = arith.constant 0 : index
    %c0_7 = arith.constant 0 : index
    %8 = vector.load %arg3[%c0_6, %c0_7] : memref<128x512xbf16, #tpu.memory_space<vmem>>, vector<128x512xbf16>
    %cst = arith.constant dense<0.000000e+00> : vector<8x512xf32>
    %9 = tpu.matmul %7, %8, %cst {dimension_numbers = #tpu.dot_dimension_numbers<[1], [0], [0], [1], [0, 0, 1, 1], [], []>} : vector<8x128xbf16>, vector<128x512xbf16>, vector<8x512xf32> -> vector<8x512xf32>
    %c0_8 = arith.constant 0 : index
    %c0_9 = arith.constant 0 : index
    %c0_10 = arith.constant 0 : index
    %10 = vector.load %arg2[%c0_8, %c0_9, %c0_10] : memref<8x8x512xbf16, #tpu.memory_space<vmem>>, vector<1x8x512xbf16>
    %11 = vector.shape_cast %10 : vector<1x8x512xbf16> to vector<8x512xbf16>
    %12 = arith.extf %11 : vector<8x512xbf16> to vector<8x512xf32>
    %13 = arith.addf %9, %12 : vector<8x512xf32>
    %14 = math.tanh %13 : vector<8x512xf32>
    %15 = vector.extract_strided_slice %14 {offsets = [0, 0], sizes = [8, 128], strides = [1, 1]} : vector<8x512xf32> to vector<8x128xf32>
    %cst_11 = arith.constant 5.000000e-01 : f32
    %16 = vector.broadcast %cst_11 : f32 to vector<8x128xf32>
    %17 = arith.mulf %15, %16 : vector<8x128xf32>
    %cst_12 = arith.constant 5.000000e-01 : f32
    %18 = vector.broadcast %cst_12 : f32 to vector<8x128xf32>
    %19 = arith.addf %17, %18 : vector<8x128xf32>
    %20 = vector.extract_strided_slice %14 {offsets = [0, 128], sizes = [8, 128], strides = [1, 1]} : vector<8x512xf32> to vector<8x128xf32>
    %cst_13 = arith.constant 5.000000e-01 : f32
    %21 = vector.broadcast %cst_13 : f32 to vector<8x128xf32>
    %22 = arith.mulf %20, %21 : vector<8x128xf32>
    %cst_14 = arith.constant 5.000000e-01 : f32
    %23 = vector.broadcast %cst_14 : f32 to vector<8x128xf32>
    %24 = arith.addf %22, %23 : vector<8x128xf32>
    %25 = vector.extract_strided_slice %14 {offsets = [0, 256], sizes = [8, 128], strides = [1, 1]} : vector<8x512xf32> to vector<8x128xf32>
    %cst_15 = arith.constant 5.000000e-01 : f32
    %26 = vector.broadcast %cst_15 : f32 to vector<8x128xf32>
    %27 = arith.mulf %25, %26 : vector<8x128xf32>
    %cst_16 = arith.constant 5.000000e-01 : f32
    %28 = vector.broadcast %cst_16 : f32 to vector<8x128xf32>
    %29 = arith.addf %27, %28 : vector<8x128xf32>
    %30 = vector.extract_strided_slice %14 {offsets = [0, 384], sizes = [8, 128], strides = [1, 1]} : vector<8x512xf32> to vector<8x128xf32>
    %31 = arith.mulf %24, %6 : vector<8x128xf32>
    %32 = arith.mulf %19, %30 : vector<8x128xf32>
    %33 = arith.addf %31, %32 : vector<8x128xf32>
    %34 = math.tanh %33 : vector<8x128xf32>
    %35 = arith.mulf %29, %34 : vector<8x128xf32>
    %c0_i32_17 = arith.constant 0 : i32
    %36 = arith.addi %4, %c0_i32_17 : i32
    %37 = vector.broadcast %36 : i32 to vector<8x1xi32>
    %38 = arith.cmpi sgt, %3, %37 : vector<8x1xi32>
    %39 = vector.shape_cast %38 : vector<8x1xi1> to vector<8x1xi1>
    %40 = vector.broadcast %39 : vector<8x1xi1> to vector<8x128xi1>
    %41 = arith.select %40, %35, %5 : vector<8x128xi1>, vector<8x128xf32>
    %42 = vector.shape_cast %38 : vector<8x1xi1> to vector<8x1xi1>
    %43 = vector.broadcast %42 : vector<8x1xi1> to vector<8x128xi1>
    %44 = arith.select %43, %33, %6 : vector<8x128xi1>, vector<8x128xf32>
    %cst_18 = arith.constant 0.000000e+00 : f32
    %45 = vector.shape_cast %38 : vector<8x1xi1> to vector<8x1xi1>
    %46 = vector.broadcast %45 : vector<8x1xi1> to vector<8x128xi1>
    %47 = vector.broadcast %cst_18 : f32 to vector<8x128xf32>
    %48 = arith.select %46, %35, %47 : vector<8x128xi1>, vector<8x128xf32>
    %49 = vector.shape_cast %48 : vector<8x128xf32> to vector<8x1x128xf32>
    %c0_19 = arith.constant 0 : index
    %c0_20 = arith.constant 0 : index
    %c0_21 = arith.constant 0 : index
    %50 = vector.load %arg4[%c0_19, %c0_20, %c0_21] : memref<8x8x128xf32, #tpu.memory_space<vmem>>, vector<8x1x128xf32>
    tpu.vector_store %arg4[%c0_19, %c0_20, %c0_21], %49 {strides = array<i32>} : memref<8x8x128xf32, #tpu.memory_space<vmem>>, vector<8x1x128xf32>,
    %51 = arith.truncf %41 : vector<8x128xf32> to vector<8x128xbf16>
    %c0_22 = arith.constant 0 : index
    %c0_23 = arith.constant 0 : index
    %52 = vector.load %arg3[%c0_22, %c0_23] : memref<128x512xbf16, #tpu.memory_space<vmem>>, vector<128x512xbf16>
    %cst_24 = arith.constant dense<0.000000e+00> : vector<8x512xf32>
    %53 = tpu.matmul %51, %52, %cst_24 {dimension_numbers = #tpu.dot_dimension_numbers<[1], [0], [0], [1], [0, 0, 1, 1], [], []>} : vector<8x128xbf16>, vector<128x512xbf16>, vector<8x512xf32> -> vector<8x512xf32>
    %c1 = arith.constant 1 : index
    %c0_25 = arith.constant 0 : index
    %c0_26 = arith.constant 0 : index
    %54 = vector.load %arg2[%c1, %c0_25, %c0_26] : memref<8x8x512xbf16, #tpu.memory_space<vmem>>, vector<1x8x512xbf16>
    %55 = vector.shape_cast %54 : vector<1x8x512xbf16> to vector<8x512xbf16>
    %56 = arith.extf %55 : vector<8x512xbf16> to vector<8x512xf32>
    %57 = arith.addf %53, %56 : vector<8x512xf32>
    %58 = math.tanh %57 : vector<8x512xf32>
    %59 = vector.extract_strided_slice %58 {offsets = [0, 0], sizes = [8, 128], strides = [1, 1]} : vector<8x512xf32> to vector<8x128xf32>
    %cst_27 = arith.constant 5.000000e-01 : f32
    %60 = vector.broadcast %cst_27 : f32 to vector<8x128xf32>
    %61 = arith.mulf %59, %60 : vector<8x128xf32>
    %cst_28 = arith.constant 5.000000e-01 : f32
    %62 = vector.broadcast %cst_28 : f32 to vector<8x128xf32>
    %63 = arith.addf %61, %62 : vector<8x128xf32>
    %64 = vector.extract_strided_slice %58 {offsets = [0, 128], sizes = [8, 128], strides = [1, 1]} : vector<8x512xf32> to vector<8x128xf32>
    %cst_29 = arith.constant 5.000000e-01 : f32
    %65 = vector.broadcast %cst_29 : f32 to vector<8x128xf32>
    %66 = arith.mulf %64, %65 : vector<8x128xf32>
    %cst_30 = arith.constant 5.000000e-01 : f32
    %67 = vector.broadcast %cst_30 : f32 to vector<8x128xf32>
    %68 = arith.addf %66, %67 : vector<8x128xf32>
    %69 = vector.extract_strided_slice %58 {offsets = [0, 256], sizes = [8, 128], strides = [1, 1]} : vector<8x512xf32> to vector<8x128xf32>
    %cst_31 = arith.constant 5.000000e-01 : f32
    %70 = vector.broadcast %cst_31 : f32 to vector<8x128xf32>
    %71 = arith.mulf %69, %70 : vector<8x128xf32>
    %cst_32 = arith.constant 5.000000e-01 : f32
    %72 = vector.broadcast %cst_32 : f32 to vector<8x128xf32>
    %73 = arith.addf %71, %72 : vector<8x128xf32>
    %74 = vector.extract_strided_slice %58 {offsets = [0, 384], sizes = [8, 128], strides = [1, 1]} : vector<8x512xf32> to vector<8x128xf32>
    %75 = arith.mulf %68, %44 : vector<8x128xf32>
    %76 = arith.mulf %63, %74 : vector<8x128xf32>
    %77 = arith.addf %75, %76 : vector<8x128xf32>
    %78 = math.tanh %77 : vector<8x128xf32>
    %79 = arith.mulf %73, %78 : vector<8x128xf32>
    %c1_i32 = arith.constant 1 : i32
    %80 = arith.addi %4, %c1_i32 : i32
    %81 = vector.broadcast %80 : i32 to vector<8x1xi32>
    %82 = arith.cmpi sgt, %3, %81 : vector<8x1xi32>
    %83 = vector.shape_cast %82 : vector<8x1xi1> to vector<8x1xi1>
    %84 = vector.broadcast %83 : vector<8x1xi1> to vector<8x128xi1>
    %85 = arith.select %84, %79, %41 : vector<8x128xi1>, vector<8x128xf32>
    %86 = vector.shape_cast %82 : vector<8x1xi1> to vector<8x1xi1>
    %87 = vector.broadcast %86 : vector<8x1xi1> to vector<8x128xi1>
    %88 = arith.select %87, %77, %44 : vector<8x128xi1>, vector<8x128xf32>
    %cst_33 = arith.constant 0.000000e+00 : f32
    %89 = vector.shape_cast %82 : vector<8x1xi1> to vector<8x1xi1>
    %90 = vector.broadcast %89 : vector<8x1xi1> to vector<8x128xi1>
    %91 = vector.broadcast %cst_33 : f32 to vector<8x128xf32>
    %92 = arith.select %90, %79, %91 : vector<8x128xi1>, vector<8x128xf32>
    %93 = vector.shape_cast %92 : vector<8x128xf32> to vector<8x1x128xf32>
    %c0_34 = arith.constant 0 : index
    %c1_35 = arith.constant 1 : index
    %c0_36 = arith.constant 0 : index
    %94 = vector.load %arg4[%c0_34, %c1_35, %c0_36] : memref<8x8x128xf32, #tpu.memory_space<vmem>>, vector<8x1x128xf32>
    tpu.vector_store %arg4[%c0_34, %c1_35, %c0_36], %93 {strides = array<i32>} : memref<8x8x128xf32, #tpu.memory_space<vmem>>, vector<8x1x128xf32>,
    %95 = arith.truncf %85 : vector<8x128xf32> to vector<8x128xbf16>
    %c0_37 = arith.constant 0 : index
    %c0_38 = arith.constant 0 : index
    %96 = vector.load %arg3[%c0_37, %c0_38] : memref<128x512xbf16, #tpu.memory_space<vmem>>, vector<128x512xbf16>
    %cst_39 = arith.constant dense<0.000000e+00> : vector<8x512xf32>
    %97 = tpu.matmul %95, %96, %cst_39 {dimension_numbers = #tpu.dot_dimension_numbers<[1], [0], [0], [1], [0, 0, 1, 1], [], []>} : vector<8x128xbf16>, vector<128x512xbf16>, vector<8x512xf32> -> vector<8x512xf32>
    %c2 = arith.constant 2 : index
    %c0_40 = arith.constant 0 : index
    %c0_41 = arith.constant 0 : index
    %98 = vector.load %arg2[%c2, %c0_40, %c0_41] : memref<8x8x512xbf16, #tpu.memory_space<vmem>>, vector<1x8x512xbf16>
    %99 = vector.shape_cast %98 : vector<1x8x512xbf16> to vector<8x512xbf16>
    %100 = arith.extf %99 : vector<8x512xbf16> to vector<8x512xf32>
    %101 = arith.addf %97, %100 : vector<8x512xf32>
    %102 = math.tanh %101 : vector<8x512xf32>
    %103 = vector.extract_strided_slice %102 {offsets = [0, 0], sizes = [8, 128], strides = [1, 1]} : vector<8x512xf32> to vector<8x128xf32>
    %cst_42 = arith.constant 5.000000e-01 : f32
    %104 = vector.broadcast %cst_42 : f32 to vector<8x128xf32>
    %105 = arith.mulf %103, %104 : vector<8x128xf32>
    %cst_43 = arith.constant 5.000000e-01 : f32
    %106 = vector.broadcast %cst_43 : f32 to vector<8x128xf32>
    %107 = arith.addf %105, %106 : vector<8x128xf32>
    %108 = vector.extract_strided_slice %102 {offsets = [0, 128], sizes = [8, 128], strides = [1, 1]} : vector<8x512xf32> to vector<8x128xf32>
    %cst_44 = arith.constant 5.000000e-01 : f32
    %109 = vector.broadcast %cst_44 : f32 to vector<8x128xf32>
    %110 = arith.mulf %108, %109 : vector<8x128xf32>
    %cst_45 = arith.constant 5.000000e-01 : f32
    %111 = vector.broadcast %cst_45 : f32 to vector<8x128xf32>
    %112 = arith.addf %110, %111 : vector<8x128xf32>
    %113 = vector.extract_strided_slice %102 {offsets = [0, 256], sizes = [8, 128], strides = [1, 1]} : vector<8x512xf32> to vector<8x128xf32>
    %cst_46 = arith.constant 5.000000e-01 : f32
    %114 = vector.broadcast %cst_46 : f32 to vector<8x128xf32>
    %115 = arith.mulf %113, %114 : vector<8x128xf32>
    %cst_47 = arith.constant 5.000000e-01 : f32
    %116 = vector.broadcast %cst_47 : f32 to vector<8x128xf32>
    %117 = arith.addf %115, %116 : vector<8x128xf32>
    %118 = vector.extract_strided_slice %102 {offsets = [0, 384], sizes = [8, 128], strides = [1, 1]} : vector<8x512xf32> to vector<8x128xf32>
    %119 = arith.mulf %112, %88 : vector<8x128xf32>
    %120 = arith.mulf %107, %118 : vector<8x128xf32>
    %121 = arith.addf %119, %120 : vector<8x128xf32>
    %122 = math.tanh %121 : vector<8x128xf32>
    %123 = arith.mulf %117, %122 : vector<8x128xf32>
    %c2_i32 = arith.constant 2 : i32
    %124 = arith.addi %4, %c2_i32 : i32
    %125 = vector.broadcast %124 : i32 to vector<8x1xi32>
    %126 = arith.cmpi sgt, %3, %125 : vector<8x1xi32>
    %127 = vector.shape_cast %126 : vector<8x1xi1> to vector<8x1xi1>
    %128 = vector.broadcast %127 : vector<8x1xi1> to vector<8x128xi1>
    %129 = arith.select %128, %123, %85 : vector<8x128xi1>, vector<8x128xf32>
    %130 = vector.shape_cast %126 : vector<8x1xi1> to vector<8x1xi1>
    %131 = vector.broadcast %130 : vector<8x1xi1> to vector<8x128xi1>
    %132 = arith.select %131, %121, %88 : vector<8x128xi1>, vector<8x128xf32>
    %cst_48 = arith.constant 0.000000e+00 : f32
    %133 = vector.shape_cast %126 : vector<8x1xi1> to vector<8x1xi1>
    %134 = vector.broadcast %133 : vector<8x1xi1> to vector<8x128xi1>
    %135 = vector.broadcast %cst_48 : f32 to vector<8x128xf32>
    %136 = arith.select %134, %123, %135 : vector<8x128xi1>, vector<8x128xf32>
    %137 = vector.shape_cast %136 : vector<8x128xf32> to vector<8x1x128xf32>
    %c0_49 = arith.constant 0 : index
    %c2_50 = arith.constant 2 : index
    %c0_51 = arith.constant 0 : index
    %138 = vector.load %arg4[%c0_49, %c2_50, %c0_51] : memref<8x8x128xf32, #tpu.memory_space<vmem>>, vector<8x1x128xf32>
    tpu.vector_store %arg4[%c0_49, %c2_50, %c0_51], %137 {strides = array<i32>} : memref<8x8x128xf32, #tpu.memory_space<vmem>>, vector<8x1x128xf32>,
    %139 = arith.truncf %129 : vector<8x128xf32> to vector<8x128xbf16>
    %c0_52 = arith.constant 0 : index
    %c0_53 = arith.constant 0 : index
    %140 = vector.load %arg3[%c0_52, %c0_53] : memref<128x512xbf16, #tpu.memory_space<vmem>>, vector<128x512xbf16>
    %cst_54 = arith.constant dense<0.000000e+00> : vector<8x512xf32>
    %141 = tpu.matmul %139, %140, %cst_54 {dimension_numbers = #tpu.dot_dimension_numbers<[1], [0], [0], [1], [0, 0, 1, 1], [], []>} : vector<8x128xbf16>, vector<128x512xbf16>, vector<8x512xf32> -> vector<8x512xf32>
    %c3 = arith.constant 3 : index
    %c0_55 = arith.constant 0 : index
    %c0_56 = arith.constant 0 : index
    %142 = vector.load %arg2[%c3, %c0_55, %c0_56] : memref<8x8x512xbf16, #tpu.memory_space<vmem>>, vector<1x8x512xbf16>
    %143 = vector.shape_cast %142 : vector<1x8x512xbf16> to vector<8x512xbf16>
    %144 = arith.extf %143 : vector<8x512xbf16> to vector<8x512xf32>
    %145 = arith.addf %141, %144 : vector<8x512xf32>
    %146 = math.tanh %145 : vector<8x512xf32>
    %147 = vector.extract_strided_slice %146 {offsets = [0, 0], sizes = [8, 128], strides = [1, 1]} : vector<8x512xf32> to vector<8x128xf32>
    %cst_57 = arith.constant 5.000000e-01 : f32
    %148 = vector.broadcast %cst_57 : f32 to vector<8x128xf32>
    %149 = arith.mulf %147, %148 : vector<8x128xf32>
    %cst_58 = arith.constant 5.000000e-01 : f32
    %150 = vector.broadcast %cst_58 : f32 to vector<8x128xf32>
    %151 = arith.addf %149, %150 : vector<8x128xf32>
    %152 = vector.extract_strided_slice %146 {offsets = [0, 128], sizes = [8, 128], strides = [1, 1]} : vector<8x512xf32> to vector<8x128xf32>
    %cst_59 = arith.constant 5.000000e-01 : f32
    %153 = vector.broadcast %cst_59 : f32 to vector<8x128xf32>
    %154 = arith.mulf %152, %153 : vector<8x128xf32>
    %cst_60 = arith.constant 5.000000e-01 : f32
    %155 = vector.broadcast %cst_60 : f32 to vector<8x128xf32>
    %156 = arith.addf %154, %155 : vector<8x128xf32>
    %157 = vector.extract_strided_slice %146 {offsets = [0, 256], sizes = [8, 128], strides = [1, 1]} : vector<8x512xf32> to vector<8x128xf32>
    %cst_61 = arith.constant 5.000000e-01 : f32
    %158 = vector.broadcast %cst_61 : f32 to vector<8x128xf32>
    %159 = arith.mulf %157, %158 : vector<8x128xf32>
    %cst_62 = arith.constant 5.000000e-01 : f32
    %160 = vector.broadcast %cst_62 : f32 to vector<8x128xf32>
    %161 = arith.addf %159, %160 : vector<8x128xf32>
    %162 = vector.extract_strided_slice %146 {offsets = [0, 384], sizes = [8, 128], strides = [1, 1]} : vector<8x512xf32> to vector<8x128xf32>
    %163 = arith.mulf %156, %132 : vector<8x128xf32>
    %164 = arith.mulf %151, %162 : vector<8x128xf32>
    %165 = arith.addf %163, %164 : vector<8x128xf32>
    %166 = math.tanh %165 : vector<8x128xf32>
    %167 = arith.mulf %161, %166 : vector<8x128xf32>
    %c3_i32 = arith.constant 3 : i32
    %168 = arith.addi %4, %c3_i32 : i32
    %169 = vector.broadcast %168 : i32 to vector<8x1xi32>
    %170 = arith.cmpi sgt, %3, %169 : vector<8x1xi32>
    %171 = vector.shape_cast %170 : vector<8x1xi1> to vector<8x1xi1>
    %172 = vector.broadcast %171 : vector<8x1xi1> to vector<8x128xi1>
    %173 = arith.select %172, %167, %129 : vector<8x128xi1>, vector<8x128xf32>
    %174 = vector.shape_cast %170 : vector<8x1xi1> to vector<8x1xi1>
    %175 = vector.broadcast %174 : vector<8x1xi1> to vector<8x128xi1>
    %176 = arith.select %175, %165, %132 : vector<8x128xi1>, vector<8x128xf32>
    %cst_63 = arith.constant 0.000000e+00 : f32
    %177 = vector.shape_cast %170 : vector<8x1xi1> to vector<8x1xi1>
    %178 = vector.broadcast %177 : vector<8x1xi1> to vector<8x128xi1>
    %179 = vector.broadcast %cst_63 : f32 to vector<8x128xf32>
    %180 = arith.select %178, %167, %179 : vector<8x128xi1>, vector<8x128xf32>
    %181 = vector.shape_cast %180 : vector<8x128xf32> to vector<8x1x128xf32>
    %c0_64 = arith.constant 0 : index
    %c3_65 = arith.constant 3 : index
    %c0_66 = arith.constant 0 : index
    %182 = vector.load %arg4[%c0_64, %c3_65, %c0_66] : memref<8x8x128xf32, #tpu.memory_space<vmem>>, vector<8x1x128xf32>
    tpu.vector_store %arg4[%c0_64, %c3_65, %c0_66], %181 {strides = array<i32>} : memref<8x8x128xf32, #tpu.memory_space<vmem>>, vector<8x1x128xf32>,
    %183 = arith.truncf %173 : vector<8x128xf32> to vector<8x128xbf16>
    %c0_67 = arith.constant 0 : index
    %c0_68 = arith.constant 0 : index
    %184 = vector.load %arg3[%c0_67, %c0_68] : memref<128x512xbf16, #tpu.memory_space<vmem>>, vector<128x512xbf16>
    %cst_69 = arith.constant dense<0.000000e+00> : vector<8x512xf32>
    %185 = tpu.matmul %183, %184, %cst_69 {dimension_numbers = #tpu.dot_dimension_numbers<[1], [0], [0], [1], [0, 0, 1, 1], [], []>} : vector<8x128xbf16>, vector<128x512xbf16>, vector<8x512xf32> -> vector<8x512xf32>
    %c4 = arith.constant 4 : index
    %c0_70 = arith.constant 0 : index
    %c0_71 = arith.constant 0 : index
    %186 = vector.load %arg2[%c4, %c0_70, %c0_71] : memref<8x8x512xbf16, #tpu.memory_space<vmem>>, vector<1x8x512xbf16>
    %187 = vector.shape_cast %186 : vector<1x8x512xbf16> to vector<8x512xbf16>
    %188 = arith.extf %187 : vector<8x512xbf16> to vector<8x512xf32>
    %189 = arith.addf %185, %188 : vector<8x512xf32>
    %190 = math.tanh %189 : vector<8x512xf32>
    %191 = vector.extract_strided_slice %190 {offsets = [0, 0], sizes = [8, 128], strides = [1, 1]} : vector<8x512xf32> to vector<8x128xf32>
    %cst_72 = arith.constant 5.000000e-01 : f32
    %192 = vector.broadcast %cst_72 : f32 to vector<8x128xf32>
    %193 = arith.mulf %191, %192 : vector<8x128xf32>
    %cst_73 = arith.constant 5.000000e-01 : f32
    %194 = vector.broadcast %cst_73 : f32 to vector<8x128xf32>
    %195 = arith.addf %193, %194 : vector<8x128xf32>
    %196 = vector.extract_strided_slice %190 {offsets = [0, 128], sizes = [8, 128], strides = [1, 1]} : vector<8x512xf32> to vector<8x128xf32>
    %cst_74 = arith.constant 5.000000e-01 : f32
    %197 = vector.broadcast %cst_74 : f32 to vector<8x128xf32>
    %198 = arith.mulf %196, %197 : vector<8x128xf32>
    %cst_75 = arith.constant 5.000000e-01 : f32
    %199 = vector.broadcast %cst_75 : f32 to vector<8x128xf32>
    %200 = arith.addf %198, %199 : vector<8x128xf32>
    %201 = vector.extract_strided_slice %190 {offsets = [0, 256], sizes = [8, 128], strides = [1, 1]} : vector<8x512xf32> to vector<8x128xf32>
    %cst_76 = arith.constant 5.000000e-01 : f32
    %202 = vector.broadcast %cst_76 : f32 to vector<8x128xf32>
    %203 = arith.mulf %201, %202 : vector<8x128xf32>
    %cst_77 = arith.constant 5.000000e-01 : f32
    %204 = vector.broadcast %cst_77 : f32 to vector<8x128xf32>
    %205 = arith.addf %203, %204 : vector<8x128xf32>
    %206 = vector.extract_strided_slice %190 {offsets = [0, 384], sizes = [8, 128], strides = [1, 1]} : vector<8x512xf32> to vector<8x128xf32>
    %207 = arith.mulf %200, %176 : vector<8x128xf32>
    %208 = arith.mulf %195, %206 : vector<8x128xf32>
    %209 = arith.addf %207, %208 : vector<8x128xf32>
    %210 = math.tanh %209 : vector<8x128xf32>
    %211 = arith.mulf %205, %210 : vector<8x128xf32>
    %c4_i32 = arith.constant 4 : i32
    %212 = arith.addi %4, %c4_i32 : i32
    %213 = vector.broadcast %212 : i32 to vector<8x1xi32>
    %214 = arith.cmpi sgt, %3, %213 : vector<8x1xi32>
    %215 = vector.shape_cast %214 : vector<8x1xi1> to vector<8x1xi1>
    %216 = vector.broadcast %215 : vector<8x1xi1> to vector<8x128xi1>
    %217 = arith.select %216, %211, %173 : vector<8x128xi1>, vector<8x128xf32>
    %218 = vector.shape_cast %214 : vector<8x1xi1> to vector<8x1xi1>
    %219 = vector.broadcast %218 : vector<8x1xi1> to vector<8x128xi1>
    %220 = arith.select %219, %209, %176 : vector<8x128xi1>, vector<8x128xf32>
    %cst_78 = arith.constant 0.000000e+00 : f32
    %221 = vector.shape_cast %214 : vector<8x1xi1> to vector<8x1xi1>
    %222 = vector.broadcast %221 : vector<8x1xi1> to vector<8x128xi1>
    %223 = vector.broadcast %cst_78 : f32 to vector<8x128xf32>
    %224 = arith.select %222, %211, %223 : vector<8x128xi1>, vector<8x128xf32>
    %225 = vector.shape_cast %224 : vector<8x128xf32> to vector<8x1x128xf32>
    %c0_79 = arith.constant 0 : index
    %c4_80 = arith.constant 4 : index
    %c0_81 = arith.constant 0 : index
    %226 = vector.load %arg4[%c0_79, %c4_80, %c0_81] : memref<8x8x128xf32, #tpu.memory_space<vmem>>, vector<8x1x128xf32>
    tpu.vector_store %arg4[%c0_79, %c4_80, %c0_81], %225 {strides = array<i32>} : memref<8x8x128xf32, #tpu.memory_space<vmem>>, vector<8x1x128xf32>,
    %227 = arith.truncf %217 : vector<8x128xf32> to vector<8x128xbf16>
    %c0_82 = arith.constant 0 : index
    %c0_83 = arith.constant 0 : index
    %228 = vector.load %arg3[%c0_82, %c0_83] : memref<128x512xbf16, #tpu.memory_space<vmem>>, vector<128x512xbf16>
    %cst_84 = arith.constant dense<0.000000e+00> : vector<8x512xf32>
    %229 = tpu.matmul %227, %228, %cst_84 {dimension_numbers = #tpu.dot_dimension_numbers<[1], [0], [0], [1], [0, 0, 1, 1], [], []>} : vector<8x128xbf16>, vector<128x512xbf16>, vector<8x512xf32> -> vector<8x512xf32>
    %c5 = arith.constant 5 : index
    %c0_85 = arith.constant 0 : index
    %c0_86 = arith.constant 0 : index
    %230 = vector.load %arg2[%c5, %c0_85, %c0_86] : memref<8x8x512xbf16, #tpu.memory_space<vmem>>, vector<1x8x512xbf16>
    %231 = vector.shape_cast %230 : vector<1x8x512xbf16> to vector<8x512xbf16>
    %232 = arith.extf %231 : vector<8x512xbf16> to vector<8x512xf32>
    %233 = arith.addf %229, %232 : vector<8x512xf32>
    %234 = math.tanh %233 : vector<8x512xf32>
    %235 = vector.extract_strided_slice %234 {offsets = [0, 0], sizes = [8, 128], strides = [1, 1]} : vector<8x512xf32> to vector<8x128xf32>
    %cst_87 = arith.constant 5.000000e-01 : f32
    %236 = vector.broadcast %cst_87 : f32 to vector<8x128xf32>
    %237 = arith.mulf %235, %236 : vector<8x128xf32>
    %cst_88 = arith.constant 5.000000e-01 : f32
    %238 = vector.broadcast %cst_88 : f32 to vector<8x128xf32>
    %239 = arith.addf %237, %238 : vector<8x128xf32>
    %240 = vector.extract_strided_slice %234 {offsets = [0, 128], sizes = [8, 128], strides = [1, 1]} : vector<8x512xf32> to vector<8x128xf32>
    %cst_89 = arith.constant 5.000000e-01 : f32
    %241 = vector.broadcast %cst_89 : f32 to vector<8x128xf32>
    %242 = arith.mulf %240, %241 : vector<8x128xf32>
    %cst_90 = arith.constant 5.000000e-01 : f32
    %243 = vector.broadcast %cst_90 : f32 to vector<8x128xf32>
    %244 = arith.addf %242, %243 : vector<8x128xf32>
    %245 = vector.extract_strided_slice %234 {offsets = [0, 256], sizes = [8, 128], strides = [1, 1]} : vector<8x512xf32> to vector<8x128xf32>
    %cst_91 = arith.constant 5.000000e-01 : f32
    %246 = vector.broadcast %cst_91 : f32 to vector<8x128xf32>
    %247 = arith.mulf %245, %246 : vector<8x128xf32>
    %cst_92 = arith.constant 5.000000e-01 : f32
    %248 = vector.broadcast %cst_92 : f32 to vector<8x128xf32>
    %249 = arith.addf %247, %248 : vector<8x128xf32>
    %250 = vector.extract_strided_slice %234 {offsets = [0, 384], sizes = [8, 128], strides = [1, 1]} : vector<8x512xf32> to vector<8x128xf32>
    %251 = arith.mulf %244, %220 : vector<8x128xf32>
    %252 = arith.mulf %239, %250 : vector<8x128xf32>
    %253 = arith.addf %251, %252 : vector<8x128xf32>
    %254 = math.tanh %253 : vector<8x128xf32>
    %255 = arith.mulf %249, %254 : vector<8x128xf32>
    %c5_i32 = arith.constant 5 : i32
    %256 = arith.addi %4, %c5_i32 : i32
    %257 = vector.broadcast %256 : i32 to vector<8x1xi32>
    %258 = arith.cmpi sgt, %3, %257 : vector<8x1xi32>
    %259 = vector.shape_cast %258 : vector<8x1xi1> to vector<8x1xi1>
    %260 = vector.broadcast %259 : vector<8x1xi1> to vector<8x128xi1>
    %261 = arith.select %260, %255, %217 : vector<8x128xi1>, vector<8x128xf32>
    %262 = vector.shape_cast %258 : vector<8x1xi1> to vector<8x1xi1>
    %263 = vector.broadcast %262 : vector<8x1xi1> to vector<8x128xi1>
    %264 = arith.select %263, %253, %220 : vector<8x128xi1>, vector<8x128xf32>
    %cst_93 = arith.constant 0.000000e+00 : f32
    %265 = vector.shape_cast %258 : vector<8x1xi1> to vector<8x1xi1>
    %266 = vector.broadcast %265 : vector<8x1xi1> to vector<8x128xi1>
    %267 = vector.broadcast %cst_93 : f32 to vector<8x128xf32>
    %268 = arith.select %266, %255, %267 : vector<8x128xi1>, vector<8x128xf32>
    %269 = vector.shape_cast %268 : vector<8x128xf32> to vector<8x1x128xf32>
    %c0_94 = arith.constant 0 : index
    %c5_95 = arith.constant 5 : index
    %c0_96 = arith.constant 0 : index
    %270 = vector.load %arg4[%c0_94, %c5_95, %c0_96] : memref<8x8x128xf32, #tpu.memory_space<vmem>>, vector<8x1x128xf32>
    tpu.vector_store %arg4[%c0_94, %c5_95, %c0_96], %269 {strides = array<i32>} : memref<8x8x128xf32, #tpu.memory_space<vmem>>, vector<8x1x128xf32>,
    %271 = arith.truncf %261 : vector<8x128xf32> to vector<8x128xbf16>
    %c0_97 = arith.constant 0 : index
    %c0_98 = arith.constant 0 : index
    %272 = vector.load %arg3[%c0_97, %c0_98] : memref<128x512xbf16, #tpu.memory_space<vmem>>, vector<128x512xbf16>
    %cst_99 = arith.constant dense<0.000000e+00> : vector<8x512xf32>
    %273 = tpu.matmul %271, %272, %cst_99 {dimension_numbers = #tpu.dot_dimension_numbers<[1], [0], [0], [1], [0, 0, 1, 1], [], []>} : vector<8x128xbf16>, vector<128x512xbf16>, vector<8x512xf32> -> vector<8x512xf32>
    %c6 = arith.constant 6 : index
    %c0_100 = arith.constant 0 : index
    %c0_101 = arith.constant 0 : index
    %274 = vector.load %arg2[%c6, %c0_100, %c0_101] : memref<8x8x512xbf16, #tpu.memory_space<vmem>>, vector<1x8x512xbf16>
    %275 = vector.shape_cast %274 : vector<1x8x512xbf16> to vector<8x512xbf16>
    %276 = arith.extf %275 : vector<8x512xbf16> to vector<8x512xf32>
    %277 = arith.addf %273, %276 : vector<8x512xf32>
    %278 = math.tanh %277 : vector<8x512xf32>
    %279 = vector.extract_strided_slice %278 {offsets = [0, 0], sizes = [8, 128], strides = [1, 1]} : vector<8x512xf32> to vector<8x128xf32>
    %cst_102 = arith.constant 5.000000e-01 : f32
    %280 = vector.broadcast %cst_102 : f32 to vector<8x128xf32>
    %281 = arith.mulf %279, %280 : vector<8x128xf32>
    %cst_103 = arith.constant 5.000000e-01 : f32
    %282 = vector.broadcast %cst_103 : f32 to vector<8x128xf32>
    %283 = arith.addf %281, %282 : vector<8x128xf32>
    %284 = vector.extract_strided_slice %278 {offsets = [0, 128], sizes = [8, 128], strides = [1, 1]} : vector<8x512xf32> to vector<8x128xf32>
    %cst_104 = arith.constant 5.000000e-01 : f32
    %285 = vector.broadcast %cst_104 : f32 to vector<8x128xf32>
    %286 = arith.mulf %284, %285 : vector<8x128xf32>
    %cst_105 = arith.constant 5.000000e-01 : f32
    %287 = vector.broadcast %cst_105 : f32 to vector<8x128xf32>
    %288 = arith.addf %286, %287 : vector<8x128xf32>
    %289 = vector.extract_strided_slice %278 {offsets = [0, 256], sizes = [8, 128], strides = [1, 1]} : vector<8x512xf32> to vector<8x128xf32>
    %cst_106 = arith.constant 5.000000e-01 : f32
    %290 = vector.broadcast %cst_106 : f32 to vector<8x128xf32>
    %291 = arith.mulf %289, %290 : vector<8x128xf32>
    %cst_107 = arith.constant 5.000000e-01 : f32
    %292 = vector.broadcast %cst_107 : f32 to vector<8x128xf32>
    %293 = arith.addf %291, %292 : vector<8x128xf32>
    %294 = vector.extract_strided_slice %278 {offsets = [0, 384], sizes = [8, 128], strides = [1, 1]} : vector<8x512xf32> to vector<8x128xf32>
    %295 = arith.mulf %288, %264 : vector<8x128xf32>
    %296 = arith.mulf %283, %294 : vector<8x128xf32>
    %297 = arith.addf %295, %296 : vector<8x128xf32>
    %298 = math.tanh %297 : vector<8x128xf32>
    %299 = arith.mulf %293, %298 : vector<8x128xf32>
    %c6_i32 = arith.constant 6 : i32
    %300 = arith.addi %4, %c6_i32 : i32
    %301 = vector.broadcast %300 : i32 to vector<8x1xi32>
    %302 = arith.cmpi sgt, %3, %301 : vector<8x1xi32>
    %303 = vector.shape_cast %302 : vector<8x1xi1> to vector<8x1xi1>
    %304 = vector.broadcast %303 : vector<8x1xi1> to vector<8x128xi1>
    %305 = arith.select %304, %299, %261 : vector<8x128xi1>, vector<8x128xf32>
    %306 = vector.shape_cast %302 : vector<8x1xi1> to vector<8x1xi1>
    %307 = vector.broadcast %306 : vector<8x1xi1> to vector<8x128xi1>
    %308 = arith.select %307, %297, %264 : vector<8x128xi1>, vector<8x128xf32>
    %cst_108 = arith.constant 0.000000e+00 : f32
    %309 = vector.shape_cast %302 : vector<8x1xi1> to vector<8x1xi1>
    %310 = vector.broadcast %309 : vector<8x1xi1> to vector<8x128xi1>
    %311 = vector.broadcast %cst_108 : f32 to vector<8x128xf32>
    %312 = arith.select %310, %299, %311 : vector<8x128xi1>, vector<8x128xf32>
    %313 = vector.shape_cast %312 : vector<8x128xf32> to vector<8x1x128xf32>
    %c0_109 = arith.constant 0 : index
    %c6_110 = arith.constant 6 : index
    %c0_111 = arith.constant 0 : index
    %314 = vector.load %arg4[%c0_109, %c6_110, %c0_111] : memref<8x8x128xf32, #tpu.memory_space<vmem>>, vector<8x1x128xf32>
    tpu.vector_store %arg4[%c0_109, %c6_110, %c0_111], %313 {strides = array<i32>} : memref<8x8x128xf32, #tpu.memory_space<vmem>>, vector<8x1x128xf32>,
    %315 = arith.truncf %305 : vector<8x128xf32> to vector<8x128xbf16>
    %c0_112 = arith.constant 0 : index
    %c0_113 = arith.constant 0 : index
    %316 = vector.load %arg3[%c0_112, %c0_113] : memref<128x512xbf16, #tpu.memory_space<vmem>>, vector<128x512xbf16>
    %cst_114 = arith.constant dense<0.000000e+00> : vector<8x512xf32>
    %317 = tpu.matmul %315, %316, %cst_114 {dimension_numbers = #tpu.dot_dimension_numbers<[1], [0], [0], [1], [0, 0, 1, 1], [], []>} : vector<8x128xbf16>, vector<128x512xbf16>, vector<8x512xf32> -> vector<8x512xf32>
    %c7 = arith.constant 7 : index
    %c0_115 = arith.constant 0 : index
    %c0_116 = arith.constant 0 : index
    %318 = vector.load %arg2[%c7, %c0_115, %c0_116] : memref<8x8x512xbf16, #tpu.memory_space<vmem>>, vector<1x8x512xbf16>
    %319 = vector.shape_cast %318 : vector<1x8x512xbf16> to vector<8x512xbf16>
    %320 = arith.extf %319 : vector<8x512xbf16> to vector<8x512xf32>
    %321 = arith.addf %317, %320 : vector<8x512xf32>
    %322 = math.tanh %321 : vector<8x512xf32>
    %323 = vector.extract_strided_slice %322 {offsets = [0, 0], sizes = [8, 128], strides = [1, 1]} : vector<8x512xf32> to vector<8x128xf32>
    %cst_117 = arith.constant 5.000000e-01 : f32
    %324 = vector.broadcast %cst_117 : f32 to vector<8x128xf32>
    %325 = arith.mulf %323, %324 : vector<8x128xf32>
    %cst_118 = arith.constant 5.000000e-01 : f32
    %326 = vector.broadcast %cst_118 : f32 to vector<8x128xf32>
    %327 = arith.addf %325, %326 : vector<8x128xf32>
    %328 = vector.extract_strided_slice %322 {offsets = [0, 128], sizes = [8, 128], strides = [1, 1]} : vector<8x512xf32> to vector<8x128xf32>
    %cst_119 = arith.constant 5.000000e-01 : f32
    %329 = vector.broadcast %cst_119 : f32 to vector<8x128xf32>
    %330 = arith.mulf %328, %329 : vector<8x128xf32>
    %cst_120 = arith.constant 5.000000e-01 : f32
    %331 = vector.broadcast %cst_120 : f32 to vector<8x128xf32>
    %332 = arith.addf %330, %331 : vector<8x128xf32>
    %333 = vector.extract_strided_slice %322 {offsets = [0, 256], sizes = [8, 128], strides = [1, 1]} : vector<8x512xf32> to vector<8x128xf32>
    %cst_121 = arith.constant 5.000000e-01 : f32
    %334 = vector.broadcast %cst_121 : f32 to vector<8x128xf32>
    %335 = arith.mulf %333, %334 : vector<8x128xf32>
    %cst_122 = arith.constant 5.000000e-01 : f32
    %336 = vector.broadcast %cst_122 : f32 to vector<8x128xf32>
    %337 = arith.addf %335, %336 : vector<8x128xf32>
    %338 = vector.extract_strided_slice %322 {offsets = [0, 384], sizes = [8, 128], strides = [1, 1]} : vector<8x512xf32> to vector<8x128xf32>
    %339 = arith.mulf %332, %308 : vector<8x128xf32>
    %340 = arith.mulf %327, %338 : vector<8x128xf32>
    %341 = arith.addf %339, %340 : vector<8x128xf32>
    %342 = math.tanh %341 : vector<8x128xf32>
    %343 = arith.mulf %337, %342 : vector<8x128xf32>
    %c7_i32 = arith.constant 7 : i32
    %344 = arith.addi %4, %c7_i32 : i32
    %345 = vector.broadcast %344 : i32 to vector<8x1xi32>
    %346 = arith.cmpi sgt, %3, %345 : vector<8x1xi32>
    %347 = vector.shape_cast %346 : vector<8x1xi1> to vector<8x1xi1>
    %348 = vector.broadcast %347 : vector<8x1xi1> to vector<8x128xi1>
    %349 = arith.select %348, %343, %305 : vector<8x128xi1>, vector<8x128xf32>
    %350 = vector.shape_cast %346 : vector<8x1xi1> to vector<8x1xi1>
    %351 = vector.broadcast %350 : vector<8x1xi1> to vector<8x128xi1>
    %352 = arith.select %351, %341, %308 : vector<8x128xi1>, vector<8x128xf32>
    %cst_123 = arith.constant 0.000000e+00 : f32
    %353 = vector.shape_cast %346 : vector<8x1xi1> to vector<8x1xi1>
    %354 = vector.broadcast %353 : vector<8x1xi1> to vector<8x128xi1>
    %355 = vector.broadcast %cst_123 : f32 to vector<8x128xf32>
    %356 = arith.select %354, %343, %355 : vector<8x128xi1>, vector<8x128xf32>
    %357 = vector.shape_cast %356 : vector<8x128xf32> to vector<8x1x128xf32>
    %c0_124 = arith.constant 0 : index
    %c7_125 = arith.constant 7 : index
    %c0_126 = arith.constant 0 : index
    %358 = vector.load %arg4[%c0_124, %c7_125, %c0_126] : memref<8x8x128xf32, #tpu.memory_space<vmem>>, vector<8x1x128xf32>
    tpu.vector_store %arg4[%c0_124, %c7_125, %c0_126], %357 {strides = array<i32>} : memref<8x8x128xf32, #tpu.memory_space<vmem>>, vector<8x1x128xf32>,
    %c0_127 = arith.constant 0 : index
    %c0_128 = arith.constant 0 : index
    %359 = vector.load %arg7[%c0_127, %c0_128] : memref<8x128xf32, #tpu.memory_space<vmem>>, vector<8x128xf32>
    tpu.vector_store %arg7[%c0_127, %c0_128], %349 {strides = array<i32>} : memref<8x128xf32, #tpu.memory_space<vmem>>, vector<8x128xf32>,
    %c0_129 = arith.constant 0 : index
    %c0_130 = arith.constant 0 : index
    %360 = vector.load %arg8[%c0_129, %c0_130] : memref<8x128xf32, #tpu.memory_space<vmem>>, vector<8x128xf32>
    tpu.vector_store %arg8[%c0_129, %c0_130], %352 {strides = array<i32>} : memref<8x128xf32, #tpu.memory_space<vmem>>, vector<8x128xf32>,
    %c0_131 = arith.constant 0 : index
    %c0_132 = arith.constant 0 : index
    %361 = vector.load %arg5[%c0_131, %c0_132] : memref<8x128xf32, #tpu.memory_space<vmem>>, vector<8x128xf32>
    tpu.vector_store %arg5[%c0_131, %c0_132], %349 {strides = array<i32>} : memref<8x128xf32, #tpu.memory_space<vmem>>, vector<8x128xf32>,
    %c0_133 = arith.constant 0 : index
    %c0_134 = arith.constant 0 : index
    %362 = vector.load %arg6[%c0_133, %c0_134] : memref<8x128xf32, #tpu.memory_space<vmem>>, vector<8x128xf32>
    tpu.vector_store %arg6[%c0_133, %c0_134], %352 {strides = array<i32>} : memref<8x128xf32, #tpu.memory_space<vmem>>, vector<8x128xf32>,
    return
  }
  func.func @transform_0(%arg0: i32) -> (i32, i32) {
    %c0_i32 = arith.constant 0 : i32
    %c0_i32_0 = arith.constant 0 : i32
    %c0_i32_1 = arith.constant 0 : i32
    return %c0_i32, %c0_i32_0 : i32, i32
  }
  func.func @transform_1(%arg0: i32) -> (i32, i32, i32) {
    %c0_i32 = arith.constant 0 : i32
    %c0_i32_0 = arith.constant 0 : i32
    %c0_i32_1 = arith.constant 0 : i32
    return %arg0, %c0_i32, %c0_i32_0 : i32, i32, i32
  }
  func.func @transform_2(%arg0: i32) -> (i32, i32) {
    %c0_i32 = arith.constant 0 : i32
    %c0_i32_0 = arith.constant 0 : i32
    %c0_i32_1 = arith.constant 0 : i32
    return %c0_i32, %c0_i32_0 : i32, i32
  }
  func.func @transform_3(%arg0: i32) -> (i32, i32, i32) {
    %c0_i32 = arith.constant 0 : i32
    %c0_i32_0 = arith.constant 0 : i32
    %c0_i32_1 = arith.constant 0 : i32
    return %c0_i32, %arg0, %c0_i32_0 : i32, i32, i32
  }
  func.func @transform_4(%arg0: i32) -> (i32, i32) {
    %c0_i32 = arith.constant 0 : i32
    %c0_i32_0 = arith.constant 0 : i32
    %c0_i32_1 = arith.constant 0 : i32
    return %c0_i32, %c0_i32_0 : i32, i32
  }
  func.func @transform_5(%arg0: i32) -> (i32, i32) {
    %c0_i32 = arith.constant 0 : i32
    %c0_i32_0 = arith.constant 0 : i32
    %c0_i32_1 = arith.constant 0 : i32
    return %c0_i32, %c0_i32_0 : i32, i32
  }
}

</mosaic_0001>

<llo_original>
// kernel: text_lstm_forward.1
$region0: #{text_lstm_forward.1}
  #allocation0 [shape = 'u32[]', space=smem, size = 0x4, offset = 0x4, fixed_abs, tag = 'smem constant byte address 0x4 - core index']
  #allocation1 [shape = 'u32[72,128]{1,0:T(1,128)}', space=vmem, size = 0x9000, scoped, tag = 'internal scratch']
  #allocation2 [shape = 'f32[8,128]{1,0:T(8,128)}', space=vmem, size = 0x1000, scoped, tag = 'scratch operand']
  #allocation3 [shape = 'f32[8,128]{1,0:T(8,128)}', space=vmem, size = 0x1000, scoped, tag = 'scratch operand']
  %s0 = inlined_call_operand.vmem [shape: s32[8,1], index: 0, kind: input, shape index: {}]
  %s1 = inlined_call_operand.vmem [shape: bf16[8,8,512], index: 1, kind: input, shape index: {}]
  %s2 = inlined_call_operand.vmem [shape: bf16[128,512], index: 2, kind: input, shape index: {}]
  %s3 = inlined_call_operand.vmem [shape: f32[8,8,128], index: 3, kind: output, shape index: {0}]
  %s4 = inlined_call_operand.vmem [shape: f32[8,128], index: 4, kind: output, shape index: {1}]
  %s5 = inlined_call_operand.vmem [shape: f32[8,128], index: 5, kind: output, shape index: {2}]
  %6 = xla_tuple %s3, %s4, %s5
  %s7 = sld [smem:[#allocation0]]
  $region42: #{text_lstm_forward.1} parent=0
    _
  %s9 = ssub.s32 1, %s7
  %s10 = scalar_select 0, %s9, %s7
  // Predicated region
  $region2: #{text_lstm_forward.1} parent=0 // pred_check
    _
  $region3: #{text_lstm_forward.1} parent=0 // pred_check_branch
    %12 = sbr.rel (0) target = $region5
  $region4: #{text_lstm_forward.1} parent=0 // pred_region
    _
  $region5: #{text_lstm_forward.1} parent=0 // pred_fallthru
    _
  // Predicated region
  $region6: #{text_lstm_forward.1} parent=0 // pred_check
    _
  $region7: #{text_lstm_forward.1} parent=0 // pred_check_branch
    %14 = sbr.rel (0) target = $region9
  $region8: #{text_lstm_forward.1} parent=0 // pred_region
    _
  $region9: #{text_lstm_forward.1} parent=0 // pred_fallthru
    _
  // Predicated region
  $region10: #{text_lstm_forward.1} parent=0 // pred_check
    _
  $region11: #{text_lstm_forward.1} parent=0 // pred_check_branch
    %16 = sbr.rel (0) target = $region13
  $region12: #{text_lstm_forward.1} parent=0 // pred_region
    _
  $region13: #{text_lstm_forward.1} parent=0 // pred_fallthru
    _
  %p17 = scmp.eq.s32.totalorder 0, 0
  // Predicated region
  $region14: #{text_lstm_forward.1} parent=0 // pred_check
    %p18 = pneg %p17
  $region15: #{text_lstm_forward.1} parent=0 // pred_check_branch
    %20 = sbr.rel (%p18) target = $region17
  $region16: #{text_lstm_forward.1} parent=0 // pred_region
    %21 = vst [vmem:[#allocation2] sm:$0xff] 0.0
    %22 = vst [vmem:[#allocation3] sm:$0xff] 0.0
  $region17: #{text_lstm_forward.1} parent=0 // pred_fallthru
    _
  %v23 = vld [vmem:[%s0] sm:$0xff]
  %s24 = smul.u32 0, 8
  %v25 = vld [vmem:[#allocation2] sm:$0xff]
  %v26 = vld [vmem:[#allocation3] sm:$0xff]
  %v27 = vpack.c.bf16 %v25, %v25
  %v28 = vld [vmem:[%s2] sm:$0xff]
  %v29 = vld [vmem:[%s2 + $0x8] sm:$0xff]
  %v30 = vld [vmem:[%s2 + $0x10] sm:$0xff]
  %v31 = vld [vmem:[%s2 + $0x18] sm:$0xff]
  %v32 = vld [vmem:[%s2 + $0x20] sm:$0xff]
  %v33 = vld [vmem:[%s2 + $0x28] sm:$0xff]
  %v34 = vld [vmem:[%s2 + $0x30] sm:$0xff]
  %v35 = vld [vmem:[%s2 + $0x38] sm:$0xff]
  %v36 = vld [vmem:[%s2 + $0x40] sm:$0xff]
  %v37 = vld [vmem:[%s2 + $0x48] sm:$0xff]
  %v38 = vld [vmem:[%s2 + $0x50] sm:$0xff]
  %v39 = vld [vmem:[%s2 + $0x58] sm:$0xff]
  %v40 = vld [vmem:[%s2 + $0x60] sm:$0xff]
  %v41 = vld [vmem:[%s2 + $0x68] sm:$0xff]
  %v42 = vld [vmem:[%s2 + $0x70] sm:$0xff]
  %v43 = vld [vmem:[%s2 + $0x78] sm:$0xff]
  %v44 = vld [vmem:[%s2 + $0x80] sm:$0xff]
  %v45 = vld [vmem:[%s2 + $0x88] sm:$0xff]
  %v46 = vld [vmem:[%s2 + $0x90] sm:$0xff]
  %v47 = vld [vmem:[%s2 + $0x98] sm:$0xff]
  %v48 = vld [vmem:[%s2 + $0xa0] sm:$0xff]
  %v49 = vld [vmem:[%s2 + $0xa8] sm:$0xff]
  %v50 = vld [vmem:[%s2 + $0xb0] sm:$0xff]
  %v51 = vld [vmem:[%s2 + $0xb8] sm:$0xff]
  %v52 = vld [vmem:[%s2 + $0xc0] sm:$0xff]
  %v53 = vld [vmem:[%s2 + $0xc8] sm:$0xff]
  %v54 = vld [vmem:[%s2 + $0xd0] sm:$0xff]
  %v55 = vld [vmem:[%s2 + $0xd8] sm:$0xff]
  %v56 = vld [vmem:[%s2 + $0xe0] sm:$0xff]
  %v57 = vld [vmem:[%s2 + $0xe8] sm:$0xff]
  %v58 = vld [vmem:[%s2 + $0xf0] sm:$0xff]
  %v59 = vld [vmem:[%s2 + $0xf8] sm:$0xff]
  %v60 = vld [vmem:[%s1] sm:$0xff]
  %v61 = vld [vmem:[%s1 + $0x8] sm:$0xff]
  %v62 = vunpack.c.l.bf16 %v60
  %v63 = vunpack.c.h.bf16 %v60
  %v64 = vunpack.c.l.bf16 %v61
  %v65 = vunpack.c.h.bf16 %v61
  %v98 = vunpack.c.l.b16 %v28
  %v99 = vunpack.c.h.b16 %v28
  %v100 = vunpack.c.l.b16 %v29
  %v101 = vunpack.c.h.b16 %v29
  %v102 = vunpack.c.l.b16 %v30
  %v103 = vunpack.c.h.b16 %v30
  %v104 = vunpack.c.l.b16 %v31
  %v105 = vunpack.c.h.b16 %v31
  %v106 = vunpack.c.l.b16 %v32
  %v107 = vunpack.c.h.b16 %v32
  %v108 = vunpack.c.l.b16 %v33
  %v109 = vunpack.c.h.b16 %v33
  %v110 = vunpack.c.l.b16 %v34
  %v111 = vunpack.c.h.b16 %v34
  %v112 = vunpack.c.l.b16 %v35
  %v113 = vunpack.c.h.b16 %v35
  %v114 = vunpack.c.l.b16 %v36
  %v115 = vunpack.c.h.b16 %v36
  %v116 = vunpack.c.l.b16 %v37
  %v117 = vunpack.c.h.b16 %v37
  %v118 = vunpack.c.l.b16 %v38
  %v119 = vunpack.c.h.b16 %v38
  %v120 = vunpack.c.l.b16 %v39
  %v121 = vunpack.c.h.b16 %v39
  %v122 = vunpack.c.l.b16 %v40
  %v123 = vunpack.c.h.b16 %v40
  %v124 = vunpack.c.l.b16 %v41
  %v125 = vunpack.c.h.b16 %v41
  %v126 = vunpack.c.l.b16 %v42
  %v127 = vunpack.c.h.b16 %v42
  %v128 = vunpack.c.l.b16 %v43
  %v129 = vunpack.c.h.b16 %v43
  %v130 = vunpack.c.l.b16 %v44
  %v131 = vunpack.c.h.b16 %v44
  %v132 = vunpack.c.l.b16 %v45
  %v133 = vunpack.c.h.b16 %v45
  %v134 = vunpack.c.l.b16 %v46
  %v135 = vunpack.c.h.b16 %v46
  %v136 = vunpack.c.l.b16 %v47
  %v137 = vunpack.c.h.b16 %v47
  %v138 = vunpack.c.l.b16 %v48
  %v139 = vunpack.c.h.b16 %v48
  %v140 = vunpack.c.l.b16 %v49
  %v141 = vunpack.c.h.b16 %v49
  %v142 = vunpack.c.l.b16 %v50
  %v143 = vunpack.c.h.b16 %v50
  %v144 = vunpack.c.l.b16 %v51
  %v145 = vunpack.c.h.b16 %v51
  %v146 = vunpack.c.l.b16 %v52
  %v147 = vunpack.c.h.b16 %v52
  %v148 = vunpack.c.l.b16 %v53
  %v149 = vunpack.c.h.b16 %v53
  %v150 = vunpack.c.l.b16 %v54
  %v151 = vunpack.c.h.b16 %v54
  %v152 = vunpack.c.l.b16 %v55
  %v153 = vunpack.c.h.b16 %v55
  %v154 = vunpack.c.l.b16 %v56
  %v155 = vunpack.c.h.b16 %v56
  %v156 = vunpack.c.l.b16 %v57
  %v157 = vunpack.c.h.b16 %v57
  %v158 = vunpack.c.l.b16 %v58
  %v159 = vunpack.c.h.b16 %v58
  %v160 = vunpack.c.l.b16 %v59
  %v161 = vunpack.c.h.b16 %v59
  %v162 = vpack.c.b16 %v102, %v98
  %v163 = vpack.c.b16 %v103, %v99
  %v164 = vpack.c.b16 %v104, %v100
  %v165 = vpack.c.b16 %v105, %v101
  %v166 = vpack.c.b16 %v110, %v106
  %v167 = vpack.c.b16 %v111, %v107
  %v168 = vpack.c.b16 %v112, %v108
  %v169 = vpack.c.b16 %v113, %v109
  %v170 = vpack.c.b16 %v118, %v114
  %v171 = vpack.c.b16 %v119, %v115
  %v172 = vpack.c.b16 %v120, %v116
  %v173 = vpack.c.b16 %v121, %v117
  %v174 = vpack.c.b16 %v126, %v122
  %v175 = vpack.c.b16 %v127, %v123
  %v176 = vpack.c.b16 %v128, %v124
  %v177 = vpack.c.b16 %v129, %v125
  %v178 = vpack.c.b16 %v134, %v130
  %v179 = vpack.c.b16 %v135, %v131
  %v180 = vpack.c.b16 %v136, %v132
  %v181 = vpack.c.b16 %v137, %v133
  %v182 = vpack.c.b16 %v142, %v138
  %v183 = vpack.c.b16 %v143, %v139
  %v184 = vpack.c.b16 %v144, %v140
  %v185 = vpack.c.b16 %v145, %v141
  %v186 = vpack.c.b16 %v150, %v146
  %v187 = vpack.c.b16 %v151, %v147
  %v188 = vpack.c.b16 %v152, %v148
  %v189 = vpack.c.b16 %v153, %v149
  %v190 = vpack.c.b16 %v158, %v154
  %v191 = vpack.c.b16 %v159, %v155
  %v192 = vpack.c.b16 %v160, %v156
  %v193 = vpack.c.b16 %v161, %v157
  %226 = vmatpush.bf16.msra.mxu0 %v190
  %227 = vmatpush.bf16.msra.mxu0 %v186
  %228 = vmatpush.bf16.msra.mxu0 %v182
  %229 = vmatpush.bf16.msra.mxu0 %v178
  %230 = vmatpush.bf16.msra.mxu0 %v174
  %231 = vmatpush.bf16.msra.mxu0 %v170
  %232 = vmatpush.bf16.msra.mxu0 %v166
  %233 = vmatpush.bf16.msra.mxu0 %v162
  %234 = vmatmul.bf16.gmra.mxu0 %v27
  %v235 = vpop.f32.mrf.mxu0
  %v236 = vadd.f32 %v62, %v235
  %v237 = vpop.f32.mrf.mxu0
  %238 = vdwg.mxu0
  %239 = vmatpush.bf16.msra.mxu0 %v191
  %240 = vmatpush.bf16.msra.mxu0 %v187
  %241 = vmatpush.bf16.msra.mxu0 %v183
  %242 = vmatpush.bf16.msra.mxu0 %v179
  %243 = vmatpush.bf16.msra.mxu0 %v175
  %244 = vmatpush.bf16.msra.mxu0 %v171
  %245 = vmatpush.bf16.msra.mxu0 %v167
  %246 = vmatpush.bf16.msra.mxu0 %v163
  %247 = vmatmul.bf16.gmra.mxu0 %v27
  %v248 = vpop.f32.mrf.mxu0
  %v249 = vadd.f32 %v63, %v248
  %v250 = vpop.f32.mrf.mxu0
  %251 = vdwg.mxu0
  %252 = vmatpush.bf16.msra.mxu0 %v192
  %253 = vmatpush.bf16.msra.mxu0 %v188
  %254 = vmatpush.bf16.msra.mxu0 %v184
  %255 = vmatpush.bf16.msra.mxu0 %v180
  %256 = vmatpush.bf16.msra.mxu0 %v176
  %257 = vmatpush.bf16.msra.mxu0 %v172
  %258 = vmatpush.bf16.msra.mxu0 %v168
  %259 = vmatpush.bf16.msra.mxu0 %v164
  %260 = vmatmul.bf16.gmra.mxu0 %v27
  %v261 = vpop.f32.mrf.mxu0
  %v262 = vadd.f32 %v64, %v261
  %v263 = vpop.f32.mrf.mxu0
  %264 = vdwg.mxu0
  %265 = vmatpush.bf16.msra.mxu0 %v193
  %266 = vmatpush.bf16.msra.mxu0 %v189
  %267 = vmatpush.bf16.msra.mxu0 %v185
  %268 = vmatpush.bf16.msra.mxu0 %v181
  %269 = vmatpush.bf16.msra.mxu0 %v177
  %270 = vmatpush.bf16.msra.mxu0 %v173
  %271 = vmatpush.bf16.msra.mxu0 %v169
  %272 = vmatpush.bf16.msra.mxu0 %v165
  %273 = vmatmul.bf16.gmra.mxu0 %v27
  %v274 = vpop.f32.mrf.mxu0
  %v275 = vadd.f32 %v65, %v274
  %v276 = vpop.f32.mrf.mxu0
  %277 = vdwg.mxu0
  %v278 = vtanh.pop %v236
  %v279 = vtanh.pop %v249
  %v280 = vtanh.pop %v262
  %v281 = vtanh.pop %v275
  %v282 = vmul.f32 %v278, 0.5
  %v283 = vadd.f32 %v282, 0.5
  %v284 = vmul.f32 %v279, 0.5
  %v285 = vadd.f32 %v284, 0.5
  %v286 = vmul.f32 %v280, 0.5
  %v287 = vadd.f32 %v286, 0.5
  %v288 = vmul.f32 %v285, %v26
  %v289 = vmul.f32 %v283, %v281
  %v290 = vadd.f32 %v288, %v289
  %v291 = vtanh.pop %v290
  %v292 = vmul.f32 %v287, %v291
  %v293 = vstv %s24
  %vm294 = vcmp.gt.s32.totalorder %v23, %v293
  %v295 = vsel %vm294, 1, 0
  %296 = vset.pattern.permute.xlu0 0
  %297 = vperm.xlu0 %296, %v295
  %v298 = vpop.permute.xlu0 %297
  %vm299 = vcmp.eq.s32.totalorder %v298, 1
  %v300 = vsel %vm299, %v292, %v25
  %v301 = vsel %vm299, %v290, %v26
  %v302 = vsel %vm299, %v292, 0.0
  %v304 = vrot.slane %v302, 1
  %v305 = vrot.slane %v302, 2
  %v306 = vrot.slane %v302, 3
  %v307 = vrot.slane %v302, 4
  %v308 = vrot.slane %v302, 5
  %v309 = vrot.slane %v302, 6
  %v310 = vrot.slane %v302, 7
  %318 = vst [vmem:[%s3] sm:$0x1] %v302
  %319 = vst [vmem:[%s3 + $0x8] sm:$0x1] %v304
  %320 = vst [vmem:[%s3 + $0x10] sm:$0x1] %v305
  %321 = vst [vmem:[%s3 + $0x18] sm:$0x1] %v306
  %322 = vst [vmem:[%s3 + $0x20] sm:$0x1] %v307
  %323 = vst [vmem:[%s3 + $0x28] sm:$0x1] %v308
  %324 = vst [vmem:[%s3 + $0x30] sm:$0x1] %v309
  %325 = vst [vmem:[%s3 + $0x38] sm:$0x1] %v310
  %v326 = vpack.c.bf16 %v300, %v300
  %v327 = vld [vmem:[%s2] sm:$0xff]
  %v328 = vld [vmem:[%s2 + $0x8] sm:$0xff]
  %v329 = vld [vmem:[%s2 + $0x10] sm:$0xff]
  %v330 = vld [vmem:[%s2 + $0x18] sm:$0xff]
  %v331 = vld [vmem:[%s2 + $0x20] sm:$0xff]
  %v332 = vld [vmem:[%s2 + $0x28] sm:$0xff]
  %v333 = vld [vmem:[%s2 + $0x30] sm:$0xff]
  %v334 = vld [vmem:[%s2 + $0x38] sm:$0xff]
  %v335 = vld [vmem:[%s2 + $0x40] sm:$0xff]
  %v336 = vld [vmem:[%s2 + $0x48] sm:$0xff]
  %v337 = vld [vmem:[%s2 + $0x50] sm:$0xff]
  %v338 = vld [vmem:[%s2 + $0x58] sm:$0xff]
  %v339 = vld [vmem:[%s2 + $0x60] sm:$0xff]
  %v340 = vld [vmem:[%s2 + $0x68] sm:$0xff]
  %v341 = vld [vmem:[%s2 + $0x70] sm:$0xff]
  %v342 = vld [vmem:[%s2 + $0x78] sm:$0xff]
  %v343 = vld [vmem:[%s2 + $0x80] sm:$0xff]
  %v344 = vld [vmem:[%s2 + $0x88] sm:$0xff]
  %v345 = vld [vmem:[%s2 + $0x90] sm:$0xff]
  %v346 = vld [vmem:[%s2 + $0x98] sm:$0xff]
  %v347 = vld [vmem:[%s2 + $0xa0] sm:$0xff]
  %v348 = vld [vmem:[%s2 + $0xa8] sm:$0xff]
  %v349 = vld [vmem:[%s2 + $0xb0] sm:$0xff]
  %v350 = vld [vmem:[%s2 + $0xb8] sm:$0xff]
  %v351 = vld [vmem:[%s2 + $0xc0] sm:$0xff]
  %v352 = vld [vmem:[%s2 + $0xc8] sm:$0xff]
  %v353 = vld [vmem:[%s2 + $0xd0] sm:$0xff]
  %v354 = vld [vmem:[%s2 + $0xd8] sm:$0xff]
  %v355 = vld [vmem:[%s2 + $0xe0] sm:$0xff]
  %v356 = vld [vmem:[%s2 + $0xe8] sm:$0xff]
  %v357 = vld [vmem:[%s2 + $0xf0] sm:$0xff]
  %v358 = vld [vmem:[%s2 + $0xf8] sm:$0xff]
  %s359 = scalar_lea.vmem %s1, 16
  %v360 = vld [vmem:[%s359] sm:$0xff]
  %v361 = vld [vmem:[%s359 + $0x8] sm:$0xff]
  %v362 = vunpack.c.l.bf16 %v360
  %v363 = vunpack.c.h.bf16 %v360
  %v364 = vunpack.c.l.bf16 %v361
  %v365 = vunpack.c.h.bf16 %v361
  %v398 = vunpack.c.l.b16 %v327
  %v399 = vunpack.c.h.b16 %v327
  %v400 = vunpack.c.l.b16 %v328
  %v401 = vunpack.c.h.b16 %v328
  %v402 = vunpack.c.l.b16 %v329
  %v403 = vunpack.c.h.b16 %v329
  %v404 = vunpack.c.l.b16 %v330
  %v405 = vunpack.c.h.b16 %v330
  %v406 = vunpack.c.l.b16 %v331
  %v407 = vunpack.c.h.b16 %v331
  %v408 = vunpack.c.l.b16 %v332
  %v409 = vunpack.c.h.b16 %v332
  %v410 = vunpack.c.l.b16 %v333
  %v411 = vunpack.c.h.b16 %v333
  %v412 = vunpack.c.l.b16 %v334
  %v413 = vunpack.c.h.b16 %v334
  %v414 = vunpack.c.l.b16 %v335
  %v415 = vunpack.c.h.b16 %v335
  %v416 = vunpack.c.l.b16 %v336
  %v417 = vunpack.c.h.b16 %v336
  %v418 = vunpack.c.l.b16 %v337
  %v419 = vunpack.c.h.b16 %v337
  %v420 = vunpack.c.l.b16 %v338
  %v421 = vunpack.c.h.b16 %v338
  %v422 = vunpack.c.l.b16 %v339
  %v423 = vunpack.c.h.b16 %v339
  %v424 = vunpack.c.l.b16 %v340
  %v425 = vunpack.c.h.b16 %v340
  %v426 = vunpack.c.l.b16 %v341
  %v427 = vunpack.c.h.b16 %v341
  %v428 = vunpack.c.l.b16 %v342
  %v429 = vunpack.c.h.b16 %v342
  %v430 = vunpack.c.l.b16 %v343
  %v431 = vunpack.c.h.b16 %v343
  %v432 = vunpack.c.l.b16 %v344
  %v433 = vunpack.c.h.b16 %v344
  %v434 = vunpack.c.l.b16 %v345
  %v435 = vunpack.c.h.b16 %v345
  %v436 = vunpack.c.l.b16 %v346
  %v437 = vunpack.c.h.b16 %v346
  %v438 = vunpack.c.l.b16 %v347
  %v439 = vunpack.c.h.b16 %v347
  %v440 = vunpack.c.l.b16 %v348
  %v441 = vunpack.c.h.b16 %v348
  %v442 = vunpack.c.l.b16 %v349
  %v443 = vunpack.c.h.b16 %v349
  %v444 = vunpack.c.l.b16 %v350
  %v445 = vunpack.c.h.b16 %v350
  %v446 = vunpack.c.l.b16 %v351
  %v447 = vunpack.c.h.b16 %v351
  %v448 = vunpack.c.l.b16 %v352
  %v449 = vunpack.c.h.b16 %v352
  %v450 = vunpack.c.l.b16 %v353
  %v451 = vunpack.c.h.b16 %v353
  %v452 = vunpack.c.l.b16 %v354
  %v453 = vunpack.c.h.b16 %v354
  %v454 = vunpack.c.l.b16 %v355
  %v455 = vunpack.c.h.b16 %v355
  %v456 = vunpack.c.l.b16 %v356
  %v457 = vunpack.c.h.b16 %v356
  %v458 = vunpack.c.l.b16 %v357
  %v459 = vunpack.c.h.b16 %v357
  %v460 = vunpack.c.l.b16 %v358
  %v461 = vunpack.c.h.b16 %v358
  %v462 = vpack.c.b16 %v402, %v398
  %v463 = vpack.c.b16 %v403, %v399
  %v464 = vpack.c.b16 %v404, %v400
  %v465 = vpack.c.b16 %v405, %v401
  %v466 = vpack.c.b16 %v410, %v406
  %v467 = vpack.c.b16 %v411, %v407
  %v468 = vpack.c.b16 %v412, %v408
  %v469 = vpack.c.b16 %v413, %v409
  %v470 = vpack.c.b16 %v418, %v414
  %v471 = vpack.c.b16 %v419, %v415
  %v472 = vpack.c.b16 %v420, %v416
  %v473 = vpack.c.b16 %v421, %v417
  %v474 = vpack.c.b16 %v426, %v422
  %v475 = vpack.c.b16 %v427, %v423
  %v476 = vpack.c.b16 %v428, %v424
  %v477 = vpack.c.b16 %v429, %v425
  %v478 = vpack.c.b16 %v434, %v430
  %v479 = vpack.c.b16 %v435, %v431
  %v480 = vpack.c.b16 %v436, %v432
  %v481 = vpack.c.b16 %v437, %v433
  %v482 = vpack.c.b16 %v442, %v438
  %v483 = vpack.c.b16 %v443, %v439
  %v484 = vpack.c.b16 %v444, %v440
  %v485 = vpack.c.b16 %v445, %v441
  %v486 = vpack.c.b16 %v450, %v446
  %v487 = vpack.c.b16 %v451, %v447
  %v488 = vpack.c.b16 %v452, %v448
  %v489 = vpack.c.b16 %v453, %v449
  %v490 = vpack.c.b16 %v458, %v454
  %v491 = vpack.c.b16 %v459, %v455
  %v492 = vpack.c.b16 %v460, %v456
  %v493 = vpack.c.b16 %v461, %v457
  %526 = vmatpush.bf16.msra.mxu0 %v490
  %527 = vmatpush.bf16.msra.mxu0 %v486
  %528 = vmatpush.bf16.msra.mxu0 %v482
  %529 = vmatpush.bf16.msra.mxu0 %v478
  %530 = vmatpush.bf16.msra.mxu0 %v474
  %531 = vmatpush.bf16.msra.mxu0 %v470
  %532 = vmatpush.bf16.msra.mxu0 %v466
  %533 = vmatpush.bf16.msra.mxu0 %v462
  %534 = vmatmul.bf16.gmra.mxu0 %v326
  %v535 = vpop.f32.mrf.mxu0
  %v536 = vadd.f32 %v362, %v535
  %v537 = vpop.f32.mrf.mxu0
  %538 = vdwg.mxu0
  %539 = vmatpush.bf16.msra.mxu0 %v491
  %540 = vmatpush.bf16.msra.mxu0 %v487
  %541 = vmatpush.bf16.msra.mxu0 %v483
  %542 = vmatpush.bf16.msra.mxu0 %v479
  %543 = vmatpush.bf16.msra.mxu0 %v475
  %544 = vmatpush.bf16.msra.mxu0 %v471
  %545 = vmatpush.bf16.msra.mxu0 %v467
  %546 = vmatpush.bf16.msra.mxu0 %v463
  %547 = vmatmul.bf16.gmra.mxu0 %v326
  %v548 = vpop.f32.mrf.mxu0
  %v549 = vadd.f32 %v363, %v548
  %v550 = vpop.f32.mrf.mxu0
  %551 = vdwg.mxu0
  %552 = vmatpush.bf16.msra.mxu0 %v492
  %553 = vmatpush.bf16.msra.mxu0 %v488
  %554 = vmatpush.bf16.msra.mxu0 %v484
  %555 = vmatpush.bf16.msra.mxu0 %v480
  %556 = vmatpush.bf16.msra.mxu0 %v476
  %557 = vmatpush.bf16.msra.mxu0 %v472
  %558 = vmatpush.bf16.msra.mxu0 %v468
  %559 = vmatpush.bf16.msra.mxu0 %v464
  %560 = vmatmul.bf16.gmra.mxu0 %v326
  %v561 = vpop.f32.mrf.mxu0
  %v562 = vadd.f32 %v364, %v561
  %v563 = vpop.f32.mrf.mxu0
  %564 = vdwg.mxu0
  %565 = vmatpush.bf16.msra.mxu0 %v493
  %566 = vmatpush.bf16.msra.mxu0 %v489
  %567 = vmatpush.bf16.msra.mxu0 %v485
  %568 = vmatpush.bf16.msra.mxu0 %v481
  %569 = vmatpush.bf16.msra.mxu0 %v477
  %570 = vmatpush.bf16.msra.mxu0 %v473
  %571 = vmatpush.bf16.msra.mxu0 %v469
  %572 = vmatpush.bf16.msra.mxu0 %v465
  %573 = vmatmul.bf16.gmra.mxu0 %v326
  %v574 = vpop.f32.mrf.mxu0
  %v575 = vadd.f32 %v365, %v574
  %v576 = vpop.f32.mrf.mxu0
  %577 = vdwg.mxu0
  %v578 = vtanh.pop %v536
  %v579 = vtanh.pop %v549
  %v580 = vtanh.pop %v562
  %v581 = vtanh.pop %v575
  %v582 = vmul.f32 %v578, 0.5
  %v583 = vadd.f32 %v582, 0.5
  %v584 = vmul.f32 %v579, 0.5
  %v585 = vadd.f32 %v584, 0.5
  %v586 = vmul.f32 %v580, 0.5
  %v587 = vadd.f32 %v586, 0.5
  %v588 = vmul.f32 %v585, %v301
  %v589 = vmul.f32 %v583, %v581
  %v590 = vadd.f32 %v588, %v589
  %v591 = vtanh.pop %v590
  %v592 = vmul.f32 %v587, %v591
  %s593 = sadd.s32 %s24, 1
  %v594 = vstv %s593
  %vm595 = vcmp.gt.s32.totalorder %v23, %v594
  %v596 = vsel %vm595, 1, 0
  %597 = vset.pattern.permute.xlu0 0
  %598 = vperm.xlu0 %597, %v596
  %v599 = vpop.permute.xlu0 %598
  %vm600 = vcmp.eq.s32.totalorder %v599, 1
  %v601 = vsel %vm600, %v592, %v300
  %v602 = vsel %vm600, %v590, %v301
  %v603 = vsel %vm600, %v592, 0.0
  %v605 = vrot.slane %v603, 1
  %v606 = vrot.slane %v603, 2
  %v607 = vrot.slane %v603, 3
  %v608 = vrot.slane %v603, 4
  %v609 = vrot.slane %v603, 5
  %v610 = vrot.slane %v603, 6
  %v611 = vrot.slane %v603, 7
  %619 = vst [vmem:[%s3 + $0x1] sm:$0x1] %v603
  %620 = vst [vmem:[%s3 + $0x9] sm:$0x1] %v605
  %621 = vst [vmem:[%s3 + $0x11] sm:$0x1] %v606
  %622 = vst [vmem:[%s3 + $0x19] sm:$0x1] %v607
  %623 = vst [vmem:[%s3 + $0x21] sm:$0x1] %v608
  %624 = vst [vmem:[%s3 + $0x29] sm:$0x1] %v609
  %625 = vst [vmem:[%s3 + $0x31] sm:$0x1] %v610
  %626 = vst [vmem:[%s3 + $0x39] sm:$0x1] %v611
  %v627 = vpack.c.bf16 %v601, %v601
  %v628 = vld [vmem:[%s2] sm:$0xff]
  %v629 = vld [vmem:[%s2 + $0x8] sm:$0xff]
  %v630 = vld [vmem:[%s2 + $0x10] sm:$0xff]
  %v631 = vld [vmem:[%s2 + $0x18] sm:$0xff]
  %v632 = vld [vmem:[%s2 + $0x20] sm:$0xff]
  %v633 = vld [vmem:[%s2 + $0x28] sm:$0xff]
  %v634 = vld [vmem:[%s2 + $0x30] sm:$0xff]
  %v635 = vld [vmem:[%s2 + $0x38] sm:$0xff]
  %v636 = vld [vmem:[%s2 + $0x40] sm:$0xff]
  %v637 = vld [vmem:[%s2 + $0x48] sm:$0xff]
  %v638 = vld [vmem:[%s2 + $0x50] sm:$0xff]
  %v639 = vld [vmem:[%s2 + $0x58] sm:$0xff]
  %v640 = vld [vmem:[%s2 + $0x60] sm:$0xff]
  %v641 = vld [vmem:[%s2 + $0x68] sm:$0xff]
  %v642 = vld [vmem:[%s2 + $0x70] sm:$0xff]
  %v643 = vld [vmem:[%s2 + $0x78] sm:$0xff]
  %v644 = vld [vmem:[%s2 + $0x80] sm:$0xff]
  %v645 = vld [vmem:[%s2 + $0x88] sm:$0xff]
  %v646 = vld [vmem:[%s2 + $0x90] sm:$0xff]
  %v647 = vld [vmem:[%s2 + $0x98] sm:$0xff]
  %v648 = vld [vmem:[%s2 + $0xa0] sm:$0xff]
  %v649 = vld [vmem:[%s2 + $0xa8] sm:$0xff]
  %v650 = vld [vmem:[%s2 + $0xb0] sm:$0xff]
  %v651 = vld [vmem:[%s2 + $0xb8] sm:$0xff]
  %v652 = vld [vmem:[%s2 + $0xc0] sm:$0xff]
  %v653 = vld [vmem:[%s2 + $0xc8] sm:$0xff]
  %v654 = vld [vmem:[%s2 + $0xd0] sm:$0xff]
  %v655 = vld [vmem:[%s2 + $0xd8] sm:$0xff]
  %v656 = vld [vmem:[%s2 + $0xe0] sm:$0xff]
  %v657 = vld [vmem:[%s2 + $0xe8] sm:$0xff]
  %v658 = vld [vmem:[%s2 + $0xf0] sm:$0xff]
  %v659 = vld [vmem:[%s2 + $0xf8] sm:$0xff]
  %s660 = scalar_lea.vmem %s1, 32
  %v661 = vld [vmem:[%s660] sm:$0xff]
  %v662 = vld [vmem:[%s660 + $0x8] sm:$0xff]
  %v663 = vunpack.c.l.bf16 %v661
  %v664 = vunpack.c.h.bf16 %v661
  %v665 = vunpack.c.l.bf16 %v662
  %v666 = vunpack.c.h.bf16 %v662
  %v699 = vunpack.c.l.b16 %v628
  %v700 = vunpack.c.h.b16 %v628
  %v701 = vunpack.c.l.b16 %v629
  %v702 = vunpack.c.h.b16 %v629
  %v703 = vunpack.c.l.b16 %v630
  %v704 = vunpack.c.h.b16 %v630
  %v705 = vunpack.c.l.b16 %v631
  %v706 = vunpack.c.h.b16 %v631
  %v707 = vunpack.c.l.b16 %v632
  %v708 = vunpack.c.h.b16 %v632
  %v709 = vunpack.c.l.b16 %v633
  %v710 = vunpack.c.h.b16 %v633
  %v711 = vunpack.c.l.b16 %v634
  %v712 = vunpack.c.h.b16 %v634
  %v713 = vunpack.c.l.b16 %v635
  %v714 = vunpack.c.h.b16 %v635
  %v715 = vunpack.c.l.b16 %v636
  %v716 = vunpack.c.h.b16 %v636
  %v717 = vunpack.c.l.b16 %v637
  %v718 = vunpack.c.h.b16 %v637
  %v719 = vunpack.c.l.b16 %v638
  %v720 = vunpack.c.h.b16 %v638
  %v721 = vunpack.c.l.b16 %v639
  %v722 = vunpack.c.h.b16 %v639
  %v723 = vunpack.c.l.b16 %v640
  %v724 = vunpack.c.h.b16 %v640
  %v725 = vunpack.c.l.b16 %v641
  %v726 = vunpack.c.h.b16 %v641
  %v727 = vunpack.c.l.b16 %v642
  %v728 = vunpack.c.h.b16 %v642
  %v729 = vunpack.c.l.b16 %v643
  %v730 = vunpack.c.h.b16 %v643
  %v731 = vunpack.c.l.b16 %v644
  %v732 = vunpack.c.h.b16 %v644
  %v733 = vunpack.c.l.b16 %v645
  %v734 = vunpack.c.h.b16 %v645
  %v735 = vunpack.c.l.b16 %v646
  %v736 = vunpack.c.h.b16 %v646
  %v737 = vunpack.c.l.b16 %v647
  %v738 = vunpack.c.h.b16 %v647
  %v739 = vunpack.c.l.b16 %v648
  %v740 = vunpack.c.h.b16 %v648
  %v741 = vunpack.c.l.b16 %v649
  %v742 = vunpack.c.h.b16 %v649
  %v743 = vunpack.c.l.b16 %v650
  %v744 = vunpack.c.h.b16 %v650
  %v745 = vunpack.c.l.b16 %v651
  %v746 = vunpack.c.h.b16 %v651
  %v747 = vunpack.c.l.b16 %v652
  %v748 = vunpack.c.h.b16 %v652
  %v749 = vunpack.c.l.b16 %v653
  %v750 = vunpack.c.h.b16 %v653
  %v751 = vunpack.c.l.b16 %v654
  %v752 = vunpack.c.h.b16 %v654
  %v753 = vunpack.c.l.b16 %v655
  %v754 = vunpack.c.h.b16 %v655
  %v755 = vunpack.c.l.b16 %v656
  %v756 = vunpack.c.h.b16 %v656
  %v757 = vunpack.c.l.b16 %v657
  %v758 = vunpack.c.h.b16 %v657
  %v759 = vunpack.c.l.b16 %v658
  %v760 = vunpack.c.h.b16 %v658
  %v761 = vunpack.c.l.b16 %v659
  %v762 = vunpack.c.h.b16 %v659
  %v763 = vpack.c.b16 %v703, %v699
  %v764 = vpack.c.b16 %v704, %v700
  %v765 = vpack.c.b16 %v705, %v701
  %v766 = vpack.c.b16 %v706, %v702
  %v767 = vpack.c.b16 %v711, %v707
  %v768 = vpack.c.b16 %v712, %v708
  %v769 = vpack.c.b16 %v713, %v709
  %v770 = vpack.c.b16 %v714, %v710
  %v771 = vpack.c.b16 %v719, %v715
  %v772 = vpack.c.b16 %v720, %v716
  %v773 = vpack.c.b16 %v721, %v717
  %v774 = vpack.c.b16 %v722, %v718
  %v775 = vpack.c.b16 %v727, %v723
  %v776 = vpack.c.b16 %v728, %v724
  %v777 = vpack.c.b16 %v729, %v725
  %v778 = vpack.c.b16 %v730, %v726
  %v779 = vpack.c.b16 %v735, %v731
  %v780 = vpack.c.b16 %v736, %v732
  %v781 = vpack.c.b16 %v737, %v733
  %v782 = vpack.c.b16 %v738, %v734
  %v783 = vpack.c.b16 %v743, %v739
  %v784 = vpack.c.b16 %v744, %v740
  %v785 = vpack.c.b16 %v745, %v741
  %v786 = vpack.c.b16 %v746, %v742
  %v787 = vpack.c.b16 %v751, %v747
  %v788 = vpack.c.b16 %v752, %v748
  %v789 = vpack.c.b16 %v753, %v749
  %v790 = vpack.c.b16 %v754, %v750
  %v791 = vpack.c.b16 %v759, %v755
  %v792 = vpack.c.b16 %v760, %v756
  %v793 = vpack.c.b16 %v761, %v757
  %v794 = vpack.c.b16 %v762, %v758
  %827 = vmatpush.bf16.msra.mxu0 %v791
  %828 = vmatpush.bf16.msra.mxu0 %v787
  %829 = vmatpush.bf16.msra.mxu0 %v783
  %830 = vmatpush.bf16.msra.mxu0 %v779
  %831 = vmatpush.bf16.msra.mxu0 %v775
  %832 = vmatpush.bf16.msra.mxu0 %v771
  %833 = vmatpush.bf16.msra.mxu0 %v767
  %834 = vmatpush.bf16.msra.mxu0 %v763
  %835 = vmatmul.bf16.gmra.mxu0 %v627
  %v836 = vpop.f32.mrf.mxu0
  %v837 = vadd.f32 %v663, %v836
  %v838 = vpop.f32.mrf.mxu0
  %839 = vdwg.mxu0
  %840 = vmatpush.bf16.msra.mxu0 %v792
  %841 = vmatpush.bf16.msra.mxu0 %v788
  %842 = vmatpush.bf16.msra.mxu0 %v784
  %843 = vmatpush.bf16.msra.mxu0 %v780
  %844 = vmatpush.bf16.msra.mxu0 %v776
  %845 = vmatpush.bf16.msra.mxu0 %v772
  %846 = vmatpush.bf16.msra.mxu0 %v768
  %847 = vmatpush.bf16.msra.mxu0 %v764
  %848 = vmatmul.bf16.gmra.mxu0 %v627
  %v849 = vpop.f32.mrf.mxu0
  %v850 = vadd.f32 %v664, %v849
  %v851 = vpop.f32.mrf.mxu0
  %852 = vdwg.mxu0
  %853 = vmatpush.bf16.msra.mxu0 %v793
  %854 = vmatpush.bf16.msra.mxu0 %v789
  %855 = vmatpush.bf16.msra.mxu0 %v785
  %856 = vmatpush.bf16.msra.mxu0 %v781
  %857 = vmatpush.bf16.msra.mxu0 %v777
  %858 = vmatpush.bf16.msra.mxu0 %v773
  %859 = vmatpush.bf16.msra.mxu0 %v769
  %860 = vmatpush.bf16.msra.mxu0 %v765
  %861 = vmatmul.bf16.gmra.mxu0 %v627
  %v862 = vpop.f32.mrf.mxu0
  %v863 = vadd.f32 %v665, %v862
  %v864 = vpop.f32.mrf.mxu0
  %865 = vdwg.mxu0
  %866 = vmatpush.bf16.msra.mxu0 %v794
  %867 = vmatpush.bf16.msra.mxu0 %v790
  %868 = vmatpush.bf16.msra.mxu0 %v786
  %869 = vmatpush.bf16.msra.mxu0 %v782
  %870 = vmatpush.bf16.msra.mxu0 %v778
  %871 = vmatpush.bf16.msra.mxu0 %v774
  %872 = vmatpush.bf16.msra.mxu0 %v770
  %873 = vmatpush.bf16.msra.mxu0 %v766
  %874 = vmatmul.bf16.gmra.mxu0 %v627
  %v875 = vpop.f32.mrf.mxu0
  %v876 = vadd.f32 %v666, %v875
  %v877 = vpop.f32.mrf.mxu0
  %878 = vdwg.mxu0
  %v879 = vtanh.pop %v837
  %v880 = vtanh.pop %v850
  %v881 = vtanh.pop %v863
  %v882 = vtanh.pop %v876
  %v883 = vmul.f32 %v879, 0.5
  %v884 = vadd.f32 %v883, 0.5
  %v885 = vmul.f32 %v880, 0.5
  %v886 = vadd.f32 %v885, 0.5
  %v887 = vmul.f32 %v881, 0.5
  %v888 = vadd.f32 %v887, 0.5
  %v889 = vmul.f32 %v886, %v602
  %v890 = vmul.f32 %v884, %v882
  %v891 = vadd.f32 %v889, %v890
  %v892 = vtanh.pop %v891
  %v893 = vmul.f32 %v888, %v892
  %s894 = sadd.s32 %s24, 2
  %v895 = vstv %s894
  %vm896 = vcmp.gt.s32.totalorder %v23, %v895
  %v897 = vsel %vm896, 1, 0
  %898 = vset.pattern.permute.xlu0 0
  %899 = vperm.xlu0 %898, %v897
  %v900 = vpop.permute.xlu0 %899
  %vm901 = vcmp.eq.s32.totalorder %v900, 1
  %v902 = vsel %vm901, %v893, %v601
  %v903 = vsel %vm901, %v891, %v602
  %v904 = vsel %vm901, %v893, 0.0
  %v906 = vrot.slane %v904, 1
  %v907 = vrot.slane %v904, 2
  %v908 = vrot.slane %v904, 3
  %v909 = vrot.slane %v904, 4
  %v910 = vrot.slane %v904, 5
  %v911 = vrot.slane %v904, 6
  %v912 = vrot.slane %v904, 7
  %920 = vst [vmem:[%s3 + $0x2] sm:$0x1] %v904
  %921 = vst [vmem:[%s3 + $0xa] sm:$0x1] %v906
  %922 = vst [vmem:[%s3 + $0x12] sm:$0x1] %v907
  %923 = vst [vmem:[%s3 + $0x1a] sm:$0x1] %v908
  %924 = vst [vmem:[%s3 + $0x22] sm:$0x1] %v909
  %925 = vst [vmem:[%s3 + $0x2a] sm:$0x1] %v910
  %926 = vst [vmem:[%s3 + $0x32] sm:$0x1] %v911
  %927 = vst [vmem:[%s3 + $0x3a] sm:$0x1] %v912
  %v928 = vpack.c.bf16 %v902, %v902
  %v929 = vld [vmem:[%s2] sm:$0xff]
  %v930 = vld [vmem:[%s2 + $0x8] sm:$0xff]
  %v931 = vld [vmem:[%s2 + $0x10] sm:$0xff]
  %v932 = vld [vmem:[%s2 + $0x18] sm:$0xff]
  %v933 = vld [vmem:[%s2 + $0x20] sm:$0xff]
  %v934 = vld [vmem:[%s2 + $0x28] sm:$0xff]
  %v935 = vld [vmem:[%s2 + $0x30] sm:$0xff]
  %v936 = vld [vmem:[%s2 + $0x38] sm:$0xff]
  %v937 = vld [vmem:[%s2 + $0x40] sm:$0xff]
  %v938 = vld [vmem:[%s2 + $0x48] sm:$0xff]
  %v939 = vld [vmem:[%s2 + $0x50] sm:$0xff]
  %v940 = vld [vmem:[%s2 + $0x58] sm:$0xff]
  %v941 = vld [vmem:[%s2 + $0x60] sm:$0xff]
  %v942 = vld [vmem:[%s2 + $0x68] sm:$0xff]
  %v943 = vld [vmem:[%s2 + $0x70] sm:$0xff]
  %v944 = vld [vmem:[%s2 + $0x78] sm:$0xff]
  %v945 = vld [vmem:[%s2 + $0x80] sm:$0xff]
  %v946 = vld [vmem:[%s2 + $0x88] sm:$0xff]
  %v947 = vld [vmem:[%s2 + $0x90] sm:$0xff]
  %v948 = vld [vmem:[%s2 + $0x98] sm:$0xff]
  %v949 = vld [vmem:[%s2 + $0xa0] sm:$0xff]
  %v950 = vld [vmem:[%s2 + $0xa8] sm:$0xff]
  %v951 = vld [vmem:[%s2 + $0xb0] sm:$0xff]
  %v952 = vld [vmem:[%s2 + $0xb8] sm:$0xff]
  %v953 = vld [vmem:[%s2 + $0xc0] sm:$0xff]
  %v954 = vld [vmem:[%s2 + $0xc8] sm:$0xff]
  %v955 = vld [vmem:[%s2 + $0xd0] sm:$0xff]
  %v956 = vld [vmem:[%s2 + $0xd8] sm:$0xff]
  %v957 = vld [vmem:[%s2 + $0xe0] sm:$0xff]
  %v958 = vld [vmem:[%s2 + $0xe8] sm:$0xff]
  %v959 = vld [vmem:[%s2 + $0xf0] sm:$0xff]
  %v960 = vld [vmem:[%s2 + $0xf8] sm:$0xff]
  %s961 = scalar_lea.vmem %s1, 48
  %v962 = vld [vmem:[%s961] sm:$0xff]
  %v963 = vld [vmem:[%s961 + $0x8] sm:$0xff]
  %v964 = vunpack.c.l.bf16 %v962
  %v965 = vunpack.c.h.bf16 %v962
  %v966 = vunpack.c.l.bf16 %v963
  %v967 = vunpack.c.h.bf16 %v963
  %v1000 = vunpack.c.l.b16 %v929
  %v1001 = vunpack.c.h.b16 %v929
  %v1002 = vunpack.c.l.b16 %v930
  %v1003 = vunpack.c.h.b16 %v930
  %v1004 = vunpack.c.l.b16 %v931
  %v1005 = vunpack.c.h.b16 %v931
  %v1006 = vunpack.c.l.b16 %v932
  %v1007 = vunpack.c.h.b16 %v932
  %v1008 = vunpack.c.l.b16 %v933
  %v1009 = vunpack.c.h.b16 %v933
  %v1010 = vunpack.c.l.b16 %v934
  %v1011 = vunpack.c.h.b16 %v934
  %v1012 = vunpack.c.l.b16 %v935
  %v1013 = vunpack.c.h.b16 %v935
  %v1014 = vunpack.c.l.b16 %v936
  %v1015 = vunpack.c.h.b16 %v936
  %v1016 = vunpack.c.l.b16 %v937
  %v1017 = vunpack.c.h.b16 %v937
  %v1018 = vunpack.c.l.b16 %v938
  %v1019 = vunpack.c.h.b16 %v938
  %v1020 = vunpack.c.l.b16 %v939
  %v1021 = vunpack.c.h.b16 %v939
  %v1022 = vunpack.c.l.b16 %v940
  %v1023 = vunpack.c.h.b16 %v940
  %v1024 = vunpack.c.l.b16 %v941
  %v1025 = vunpack.c.h.b16 %v941
  %v1026 = vunpack.c.l.b16 %v942
  %v1027 = vunpack.c.h.b16 %v942
  %v1028 = vunpack.c.l.b16 %v943
  %v1029 = vunpack.c.h.b16 %v943
  %v1030 = vunpack.c.l.b16 %v944
  %v1031 = vunpack.c.h.b16 %v944
  %v1032 = vunpack.c.l.b16 %v945
  %v1033 = vunpack.c.h.b16 %v945
  %v1034 = vunpack.c.l.b16 %v946
  %v1035 = vunpack.c.h.b16 %v946
  %v1036 = vunpack.c.l.b16 %v947
  %v1037 = vunpack.c.h.b16 %v947
  %v1038 = vunpack.c.l.b16 %v948
  %v1039 = vunpack.c.h.b16 %v948
  %v1040 = vunpack.c.l.b16 %v949
  %v1041 = vunpack.c.h.b16 %v949
  %v1042 = vunpack.c.l.b16 %v950
  %v1043 = vunpack.c.h.b16 %v950
  %v1044 = vunpack.c.l.b16 %v951
  %v1045 = vunpack.c.h.b16 %v951
  %v1046 = vunpack.c.l.b16 %v952
  %v1047 = vunpack.c.h.b16 %v952
  %v1048 = vunpack.c.l.b16 %v953
  %v1049 = vunpack.c.h.b16 %v953
  %v1050 = vunpack.c.l.b16 %v954
  %v1051 = vunpack.c.h.b16 %v954
  %v1052 = vunpack.c.l.b16 %v955
  %v1053 = vunpack.c.h.b16 %v955
  %v1054 = vunpack.c.l.b16 %v956
  %v1055 = vunpack.c.h.b16 %v956
  %v1056 = vunpack.c.l.b16 %v957
  %v1057 = vunpack.c.h.b16 %v957
  %v1058 = vunpack.c.l.b16 %v958
  %v1059 = vunpack.c.h.b16 %v958
  %v1060 = vunpack.c.l.b16 %v959
  %v1061 = vunpack.c.h.b16 %v959
  %v1062 = vunpack.c.l.b16 %v960
  %v1063 = vunpack.c.h.b16 %v960
  %v1064 = vpack.c.b16 %v1004, %v1000
  %v1065 = vpack.c.b16 %v1005, %v1001
  %v1066 = vpack.c.b16 %v1006, %v1002
  %v1067 = vpack.c.b16 %v1007, %v1003
  %v1068 = vpack.c.b16 %v1012, %v1008
  %v1069 = vpack.c.b16 %v1013, %v1009
  %v1070 = vpack.c.b16 %v1014, %v1010
  %v1071 = vpack.c.b16 %v1015, %v1011
  %v1072 = vpack.c.b16 %v1020, %v1016
  %v1073 = vpack.c.b16 %v1021, %v1017
  %v1074 = vpack.c.b16 %v1022, %v1018
  %v1075 = vpack.c.b16 %v1023, %v1019
  %v1076 = vpack.c.b16 %v1028, %v1024
  %v1077 = vpack.c.b16 %v1029, %v1025
  %v1078 = vpack.c.b16 %v1030, %v1026
  %v1079 = vpack.c.b16 %v1031, %v1027
  %v1080 = vpack.c.b16 %v1036, %v1032
  %v1081 = vpack.c.b16 %v1037, %v1033
  %v1082 = vpack.c.b16 %v1038, %v1034
  %v1083 = vpack.c.b16 %v1039, %v1035
  %v1084 = vpack.c.b16 %v1044, %v1040
  %v1085 = vpack.c.b16 %v1045, %v1041
  %v1086 = vpack.c.b16 %v1046, %v1042
  %v1087 = vpack.c.b16 %v1047, %v1043
  %v1088 = vpack.c.b16 %v1052, %v1048
  %v1089 = vpack.c.b16 %v1053, %v1049
  %v1090 = vpack.c.b16 %v1054, %v1050
  %v1091 = vpack.c.b16 %v1055, %v1051
  %v1092 = vpack.c.b16 %v1060, %v1056
  %v1093 = vpack.c.b16 %v1061, %v1057
  %v1094 = vpack.c.b16 %v1062, %v1058
  %v1095 = vpack.c.b16 %v1063, %v1059
  %1128 = vmatpush.bf16.msra.mxu0 %v1092
  %1129 = vmatpush.bf16.msra.mxu0 %v1088
  %1130 = vmatpush.bf16.msra.mxu0 %v1084
  %1131 = vmatpush.bf16.msra.mxu0 %v1080
  %1132 = vmatpush.bf16.msra.mxu0 %v1076
  %1133 = vmatpush.bf16.msra.mxu0 %v1072
  %1134 = vmatpush.bf16.msra.mxu0 %v1068
  %1135 = vmatpush.bf16.msra.mxu0 %v1064
  %1136 = vmatmul.bf16.gmra.mxu0 %v928
  %v1137 = vpop.f32.mrf.mxu0
  %v1138 = vadd.f32 %v964, %v1137
  %v1139 = vpop.f32.mrf.mxu0
  %1140 = vdwg.mxu0
  %1141 = vmatpush.bf16.msra.mxu0 %v1093
  %1142 = vmatpush.bf16.msra.mxu0 %v1089
  %1143 = vmatpush.bf16.msra.mxu0 %v1085
  %1144 = vmatpush.bf16.msra.mxu0 %v1081
  %1145 = vmatpush.bf16.msra.mxu0 %v1077
  %1146 = vmatpush.bf16.msra.mxu0 %v1073
  %1147 = vmatpush.bf16.msra.mxu0 %v1069
  %1148 = vmatpush.bf16.msra.mxu0 %v1065
  %1149 = vmatmul.bf16.gmra.mxu0 %v928
  %v1150 = vpop.f32.mrf.mxu0
  %v1151 = vadd.f32 %v965, %v1150
  %v1152 = vpop.f32.mrf.mxu0
  %1153 = vdwg.mxu0
  %1154 = vmatpush.bf16.msra.mxu0 %v1094
  %1155 = vmatpush.bf16.msra.mxu0 %v1090
  %1156 = vmatpush.bf16.msra.mxu0 %v1086
  %1157 = vmatpush.bf16.msra.mxu0 %v1082
  %1158 = vmatpush.bf16.msra.mxu0 %v1078
  %1159 = vmatpush.bf16.msra.mxu0 %v1074
  %1160 = vmatpush.bf16.msra.mxu0 %v1070
  %1161 = vmatpush.bf16.msra.mxu0 %v1066
  %1162 = vmatmul.bf16.gmra.mxu0 %v928
  %v1163 = vpop.f32.mrf.mxu0
  %v1164 = vadd.f32 %v966, %v1163
  %v1165 = vpop.f32.mrf.mxu0
  %1166 = vdwg.mxu0
  %1167 = vmatpush.bf16.msra.mxu0 %v1095
  %1168 = vmatpush.bf16.msra.mxu0 %v1091
  %1169 = vmatpush.bf16.msra.mxu0 %v1087
  %1170 = vmatpush.bf16.msra.mxu0 %v1083
  %1171 = vmatpush.bf16.msra.mxu0 %v1079
  %1172 = vmatpush.bf16.msra.mxu0 %v1075
  %1173 = vmatpush.bf16.msra.mxu0 %v1071
  %1174 = vmatpush.bf16.msra.mxu0 %v1067
  %1175 = vmatmul.bf16.gmra.mxu0 %v928
  %v1176 = vpop.f32.mrf.mxu0
  %v1177 = vadd.f32 %v967, %v1176
  %v1178 = vpop.f32.mrf.mxu0
  %1179 = vdwg.mxu0
  %v1180 = vtanh.pop %v1138
  %v1181 = vtanh.pop %v1151
  %v1182 = vtanh.pop %v1164
  %v1183 = vtanh.pop %v1177
  %v1184 = vmul.f32 %v1180, 0.5
  %v1185 = vadd.f32 %v1184, 0.5
  %v1186 = vmul.f32 %v1181, 0.5
  %v1187 = vadd.f32 %v1186, 0.5
  %v1188 = vmul.f32 %v1182, 0.5
  %v1189 = vadd.f32 %v1188, 0.5
  %v1190 = vmul.f32 %v1187, %v903
  %v1191 = vmul.f32 %v1185, %v1183
  %v1192 = vadd.f32 %v1190, %v1191
  %v1193 = vtanh.pop %v1192
  %v1194 = vmul.f32 %v1189, %v1193
  %s1195 = sadd.s32 %s24, 3
  %v1196 = vstv %s1195
  %vm1197 = vcmp.gt.s32.totalorder %v23, %v1196
  %v1198 = vsel %vm1197, 1, 0
  %1199 = vset.pattern.permute.xlu0 0
  %1200 = vperm.xlu0 %1199, %v1198
  %v1201 = vpop.permute.xlu0 %1200
  %vm1202 = vcmp.eq.s32.totalorder %v1201, 1
  %v1203 = vsel %vm1202, %v1194, %v902
  %v1204 = vsel %vm1202, %v1192, %v903
  %v1205 = vsel %vm1202, %v1194, 0.0
  %v1207 = vrot.slane %v1205, 1
  %v1208 = vrot.slane %v1205, 2
  %v1209 = vrot.slane %v1205, 3
  %v1210 = vrot.slane %v1205, 4
  %v1211 = vrot.slane %v1205, 5
  %v1212 = vrot.slane %v1205, 6
  %v1213 = vrot.slane %v1205, 7
  %1221 = vst [vmem:[%s3 + $0x3] sm:$0x1] %v1205
  %1222 = vst [vmem:[%s3 + $0xb] sm:$0x1] %v1207
  %1223 = vst [vmem:[%s3 + $0x13] sm:$0x1] %v1208
  %1224 = vst [vmem:[%s3 + $0x1b] sm:$0x1] %v1209
  %1225 = vst [vmem:[%s3 + $0x23] sm:$0x1] %v1210
  %1226 = vst [vmem:[%s3 + $0x2b] sm:$0x1] %v1211
  %1227 = vst [vmem:[%s3 + $0x33] sm:$0x1] %v1212
  %1228 = vst [vmem:[%s3 + $0x3b] sm:$0x1] %v1213
  %v1229 = vpack.c.bf16 %v1203, %v1203
  %v1230 = vld [vmem:[%s2] sm:$0xff]
  %v1231 = vld [vmem:[%s2 + $0x8] sm:$0xff]
  %v1232 = vld [vmem:[%s2 + $0x10] sm:$0xff]
  %v1233 = vld [vmem:[%s2 + $0x18] sm:$0xff]
  %v1234 = vld [vmem:[%s2 + $0x20] sm:$0xff]
  %v1235 = vld [vmem:[%s2 + $0x28] sm:$0xff]
  %v1236 = vld [vmem:[%s2 + $0x30] sm:$0xff]
  %v1237 = vld [vmem:[%s2 + $0x38] sm:$0xff]
  %v1238 = vld [vmem:[%s2 + $0x40] sm:$0xff]
  %v1239 = vld [vmem:[%s2 + $0x48] sm:$0xff]
  %v1240 = vld [vmem:[%s2 + $0x50] sm:$0xff]
  %v1241 = vld [vmem:[%s2 + $0x58] sm:$0xff]
  %v1242 = vld [vmem:[%s2 + $0x60] sm:$0xff]
  %v1243 = vld [vmem:[%s2 + $0x68] sm:$0xff]
  %v1244 = vld [vmem:[%s2 + $0x70] sm:$0xff]
  %v1245 = vld [vmem:[%s2 + $0x78] sm:$0xff]
  %v1246 = vld [vmem:[%s2 + $0x80] sm:$0xff]
  %v1247 = vld [vmem:[%s2 + $0x88] sm:$0xff]
  %v1248 = vld [vmem:[%s2 + $0x90] sm:$0xff]
  %v1249 = vld [vmem:[%s2 + $0x98] sm:$0xff]
  %v1250 = vld [vmem:[%s2 + $0xa0] sm:$0xff]
  %v1251 = vld [vmem:[%s2 + $0xa8] sm:$0xff]
  %v1252 = vld [vmem:[%s2 + $0xb0] sm:$0xff]
  %v1253 = vld [vmem:[%s2 + $0xb8] sm:$0xff]
  %v1254 = vld [vmem:[%s2 + $0xc0] sm:$0xff]
  %v1255 = vld [vmem:[%s2 + $0xc8] sm:$0xff]
  %v1256 = vld [vmem:[%s2 + $0xd0] sm:$0xff]
  %v1257 = vld [vmem:[%s2 + $0xd8] sm:$0xff]
  %v1258 = vld [vmem:[%s2 + $0xe0] sm:$0xff]
  %v1259 = vld [vmem:[%s2 + $0xe8] sm:$0xff]
  %v1260 = vld [vmem:[%s2 + $0xf0] sm:$0xff]
  %v1261 = vld [vmem:[%s2 + $0xf8] sm:$0xff]
  %s1262 = scalar_lea.vmem %s1, 64
  %v1263 = vld [vmem:[%s1262] sm:$0xff]
  %v1264 = vld [vmem:[%s1262 + $0x8] sm:$0xff]
  %v1265 = vunpack.c.l.bf16 %v1263
  %v1266 = vunpack.c.h.bf16 %v1263
  %v1267 = vunpack.c.l.bf16 %v1264
  %v1268 = vunpack.c.h.bf16 %v1264
  %v1301 = vunpack.c.l.b16 %v1230
  %v1302 = vunpack.c.h.b16 %v1230
  %v1303 = vunpack.c.l.b16 %v1231
  %v1304 = vunpack.c.h.b16 %v1231
  %v1305 = vunpack.c.l.b16 %v1232
  %v1306 = vunpack.c.h.b16 %v1232
  %v1307 = vunpack.c.l.b16 %v1233
  %v1308 = vunpack.c.h.b16 %v1233
  %v1309 = vunpack.c.l.b16 %v1234
  %v1310 = vunpack.c.h.b16 %v1234
  %v1311 = vunpack.c.l.b16 %v1235
  %v1312 = vunpack.c.h.b16 %v1235
  %v1313 = vunpack.c.l.b16 %v1236
  %v1314 = vunpack.c.h.b16 %v1236
  %v1315 = vunpack.c.l.b16 %v1237
  %v1316 = vunpack.c.h.b16 %v1237
  %v1317 = vunpack.c.l.b16 %v1238
  %v1318 = vunpack.c.h.b16 %v1238
  %v1319 = vunpack.c.l.b16 %v1239
  %v1320 = vunpack.c.h.b16 %v1239
  %v1321 = vunpack.c.l.b16 %v1240
  %v1322 = vunpack.c.h.b16 %v1240
  %v1323 = vunpack.c.l.b16 %v1241
  %v1324 = vunpack.c.h.b16 %v1241
  %v1325 = vunpack.c.l.b16 %v1242
  %v1326 = vunpack.c.h.b16 %v1242
  %v1327 = vunpack.c.l.b16 %v1243
  %v1328 = vunpack.c.h.b16 %v1243
  %v1329 = vunpack.c.l.b16 %v1244
  %v1330 = vunpack.c.h.b16 %v1244
  %v1331 = vunpack.c.l.b16 %v1245
  %v1332 = vunpack.c.h.b16 %v1245
  %v1333 = vunpack.c.l.b16 %v1246
  %v1334 = vunpack.c.h.b16 %v1246
  %v1335 = vunpack.c.l.b16 %v1247
  %v1336 = vunpack.c.h.b16 %v1247
  %v1337 = vunpack.c.l.b16 %v1248
  %v1338 = vunpack.c.h.b16 %v1248
  %v1339 = vunpack.c.l.b16 %v1249
  %v1340 = vunpack.c.h.b16 %v1249
  %v1341 = vunpack.c.l.b16 %v1250
  %v1342 = vunpack.c.h.b16 %v1250
  %v1343 = vunpack.c.l.b16 %v1251
  %v1344 = vunpack.c.h.b16 %v1251
  %v1345 = vunpack.c.l.b16 %v1252
  %v1346 = vunpack.c.h.b16 %v1252
  %v1347 = vunpack.c.l.b16 %v1253
  %v1348 = vunpack.c.h.b16 %v1253
  %v1349 = vunpack.c.l.b16 %v1254
  %v1350 = vunpack.c.h.b16 %v1254
  %v1351 = vunpack.c.l.b16 %v1255
  %v1352 = vunpack.c.h.b16 %v1255
  %v1353 = vunpack.c.l.b16 %v1256
  %v1354 = vunpack.c.h.b16 %v1256
  %v1355 = vunpack.c.l.b16 %v1257
  %v1356 = vunpack.c.h.b16 %v1257
  %v1357 = vunpack.c.l.b16 %v1258
  %v1358 = vunpack.c.h.b16 %v1258
  %v1359 = vunpack.c.l.b16 %v1259
  %v1360 = vunpack.c.h.b16 %v1259
  %v1361 = vunpack.c.l.b16 %v1260
  %v1362 = vunpack.c.h.b16 %v1260
  %v1363 = vunpack.c.l.b16 %v1261
  %v1364 = vunpack.c.h.b16 %v1261
  %v1365 = vpack.c.b16 %v1305, %v1301
  %v1366 = vpack.c.b16 %v1306, %v1302
  %v1367 = vpack.c.b16 %v1307, %v1303
  %v1368 = vpack.c.b16 %v1308, %v1304
  %v1369 = vpack.c.b16 %v1313, %v1309
  %v1370 = vpack.c.b16 %v1314, %v1310
  %v1371 = vpack.c.b16 %v1315, %v1311
  %v1372 = vpack.c.b16 %v1316, %v1312
  %v1373 = vpack.c.b16 %v1321, %v1317
  %v1374 = vpack.c.b16 %v1322, %v1318
  %v1375 = vpack.c.b16 %v1323, %v1319
  %v1376 = vpack.c.b16 %v1324, %v1320
  %v1377 = vpack.c.b16 %v1329, %v1325
  %v1378 = vpack.c.b16 %v1330, %v1326
  %v1379 = vpack.c.b16 %v1331, %v1327
  %v1380 = vpack.c.b16 %v1332, %v1328
  %v1381 = vpack.c.b16 %v1337, %v1333
  %v1382 = vpack.c.b16 %v1338, %v1334
  %v1383 = vpack.c.b16 %v1339, %v1335
  %v1384 = vpack.c.b16 %v1340, %v1336
  %v1385 = vpack.c.b16 %v1345, %v1341
  %v1386 = vpack.c.b16 %v1346, %v1342
  %v1387 = vpack.c.b16 %v1347, %v1343
  %v1388 = vpack.c.b16 %v1348, %v1344
  %v1389 = vpack.c.b16 %v1353, %v1349
  %v1390 = vpack.c.b16 %v1354, %v1350
  %v1391 = vpack.c.b16 %v1355, %v1351
  %v1392 = vpack.c.b16 %v1356, %v1352
  %v1393 = vpack.c.b16 %v1361, %v1357
  %v1394 = vpack.c.b16 %v1362, %v1358
  %v1395 = vpack.c.b16 %v1363, %v1359
  %v1396 = vpack.c.b16 %v1364, %v1360
  %1429 = vmatpush.bf16.msra.mxu0 %v1393
  %1430 = vmatpush.bf16.msra.mxu0 %v1389
  %1431 = vmatpush.bf16.msra.mxu0 %v1385
  %1432 = vmatpush.bf16.msra.mxu0 %v1381
  %1433 = vmatpush.bf16.msra.mxu0 %v1377
  %1434 = vmatpush.bf16.msra.mxu0 %v1373
  %1435 = vmatpush.bf16.msra.mxu0 %v1369
  %1436 = vmatpush.bf16.msra.mxu0 %v1365
  %1437 = vmatmul.bf16.gmra.mxu0 %v1229
  %v1438 = vpop.f32.mrf.mxu0
  %v1439 = vadd.f32 %v1265, %v1438
  %v1440 = vpop.f32.mrf.mxu0
  %1441 = vdwg.mxu0
  %1442 = vmatpush.bf16.msra.mxu0 %v1394
  %1443 = vmatpush.bf16.msra.mxu0 %v1390
  %1444 = vmatpush.bf16.msra.mxu0 %v1386
  %1445 = vmatpush.bf16.msra.mxu0 %v1382
  %1446 = vmatpush.bf16.msra.mxu0 %v1378
  %1447 = vmatpush.bf16.msra.mxu0 %v1374
  %1448 = vmatpush.bf16.msra.mxu0 %v1370
  %1449 = vmatpush.bf16.msra.mxu0 %v1366
  %1450 = vmatmul.bf16.gmra.mxu0 %v1229
  %v1451 = vpop.f32.mrf.mxu0
  %v1452 = vadd.f32 %v1266, %v1451
  %v1453 = vpop.f32.mrf.mxu0
  %1454 = vdwg.mxu0
  %1455 = vmatpush.bf16.msra.mxu0 %v1395
  %1456 = vmatpush.bf16.msra.mxu0 %v1391
  %1457 = vmatpush.bf16.msra.mxu0 %v1387
  %1458 = vmatpush.bf16.msra.mxu0 %v1383
  %1459 = vmatpush.bf16.msra.mxu0 %v1379
  %1460 = vmatpush.bf16.msra.mxu0 %v1375
  %1461 = vmatpush.bf16.msra.mxu0 %v1371
  %1462 = vmatpush.bf16.msra.mxu0 %v1367
  %1463 = vmatmul.bf16.gmra.mxu0 %v1229
  %v1464 = vpop.f32.mrf.mxu0
  %v1465 = vadd.f32 %v1267, %v1464
  %v1466 = vpop.f32.mrf.mxu0
  %1467 = vdwg.mxu0
  %1468 = vmatpush.bf16.msra.mxu0 %v1396
  %1469 = vmatpush.bf16.msra.mxu0 %v1392
  %1470 = vmatpush.bf16.msra.mxu0 %v1388
  %1471 = vmatpush.bf16.msra.mxu0 %v1384
  %1472 = vmatpush.bf16.msra.mxu0 %v1380
  %1473 = vmatpush.bf16.msra.mxu0 %v1376
  %1474 = vmatpush.bf16.msra.mxu0 %v1372
  %1475 = vmatpush.bf16.msra.mxu0 %v1368
  %1476 = vmatmul.bf16.gmra.mxu0 %v1229
  %v1477 = vpop.f32.mrf.mxu0
  %v1478 = vadd.f32 %v1268, %v1477
  %v1479 = vpop.f32.mrf.mxu0
  %1480 = vdwg.mxu0
  %v1481 = vtanh.pop %v1439
  %v1482 = vtanh.pop %v1452
  %v1483 = vtanh.pop %v1465
  %v1484 = vtanh.pop %v1478
  %v1485 = vmul.f32 %v1481, 0.5
  %v1486 = vadd.f32 %v1485, 0.5
  %v1487 = vmul.f32 %v1482, 0.5
  %v1488 = vadd.f32 %v1487, 0.5
  %v1489 = vmul.f32 %v1483, 0.5
  %v1490 = vadd.f32 %v1489, 0.5
  %v1491 = vmul.f32 %v1488, %v1204
  %v1492 = vmul.f32 %v1486, %v1484
  %v1493 = vadd.f32 %v1491, %v1492
  %v1494 = vtanh.pop %v1493
  %v1495 = vmul.f32 %v1490, %v1494
  %s1496 = sadd.s32 %s24, 4
  %v1497 = vstv %s1496
  %vm1498 = vcmp.gt.s32.totalorder %v23, %v1497
  %v1499 = vsel %vm1498, 1, 0
  %1500 = vset.pattern.permute.xlu0 0
  %1501 = vperm.xlu0 %1500, %v1499
  %v1502 = vpop.permute.xlu0 %1501
  %vm1503 = vcmp.eq.s32.totalorder %v1502, 1
  %v1504 = vsel %vm1503, %v1495, %v1203
  %v1505 = vsel %vm1503, %v1493, %v1204
  %v1506 = vsel %vm1503, %v1495, 0.0
  %v1508 = vrot.slane %v1506, 1
  %v1509 = vrot.slane %v1506, 2
  %v1510 = vrot.slane %v1506, 3
  %v1511 = vrot.slane %v1506, 4
  %v1512 = vrot.slane %v1506, 5
  %v1513 = vrot.slane %v1506, 6
  %v1514 = vrot.slane %v1506, 7
  %1522 = vst [vmem:[%s3 + $0x4] sm:$0x1] %v1506
  %1523 = vst [vmem:[%s3 + $0xc] sm:$0x1] %v1508
  %1524 = vst [vmem:[%s3 + $0x14] sm:$0x1] %v1509
  %1525 = vst [vmem:[%s3 + $0x1c] sm:$0x1] %v1510
  %1526 = vst [vmem:[%s3 + $0x24] sm:$0x1] %v1511
  %1527 = vst [vmem:[%s3 + $0x2c] sm:$0x1] %v1512
  %1528 = vst [vmem:[%s3 + $0x34] sm:$0x1] %v1513
  %1529 = vst [vmem:[%s3 + $0x3c] sm:$0x1] %v1514
  %v1530 = vpack.c.bf16 %v1504, %v1504
  %v1531 = vld [vmem:[%s2] sm:$0xff]
  %v1532 = vld [vmem:[%s2 + $0x8] sm:$0xff]
  %v1533 = vld [vmem:[%s2 + $0x10] sm:$0xff]
  %v1534 = vld [vmem:[%s2 + $0x18] sm:$0xff]
  %v1535 = vld [vmem:[%s2 + $0x20] sm:$0xff]
  %v1536 = vld [vmem:[%s2 + $0x28] sm:$0xff]
  %v1537 = vld [vmem:[%s2 + $0x30] sm:$0xff]
  %v1538 = vld [vmem:[%s2 + $0x38] sm:$0xff]
  %v1539 = vld [vmem:[%s2 + $0x40] sm:$0xff]
  %v1540 = vld [vmem:[%s2 + $0x48] sm:$0xff]
  %v1541 = vld [vmem:[%s2 + $0x50] sm:$0xff]
  %v1542 = vld [vmem:[%s2 + $0x58] sm:$0xff]
  %v1543 = vld [vmem:[%s2 + $0x60] sm:$0xff]
  %v1544 = vld [vmem:[%s2 + $0x68] sm:$0xff]
  %v1545 = vld [vmem:[%s2 + $0x70] sm:$0xff]
  %v1546 = vld [vmem:[%s2 + $0x78] sm:$0xff]
  %v1547 = vld [vmem:[%s2 + $0x80] sm:$0xff]
  %v1548 = vld [vmem:[%s2 + $0x88] sm:$0xff]
  %v1549 = vld [vmem:[%s2 + $0x90] sm:$0xff]
  %v1550 = vld [vmem:[%s2 + $0x98] sm:$0xff]
  %v1551 = vld [vmem:[%s2 + $0xa0] sm:$0xff]
  %v1552 = vld [vmem:[%s2 + $0xa8] sm:$0xff]
  %v1553 = vld [vmem:[%s2 + $0xb0] sm:$0xff]
  %v1554 = vld [vmem:[%s2 + $0xb8] sm:$0xff]
  %v1555 = vld [vmem:[%s2 + $0xc0] sm:$0xff]
  %v1556 = vld [vmem:[%s2 + $0xc8] sm:$0xff]
  %v1557 = vld [vmem:[%s2 + $0xd0] sm:$0xff]
  %v1558 = vld [vmem:[%s2 + $0xd8] sm:$0xff]
  %v1559 = vld [vmem:[%s2 + $0xe0] sm:$0xff]
  %v1560 = vld [vmem:[%s2 + $0xe8] sm:$0xff]
  %v1561 = vld [vmem:[%s2 + $0xf0] sm:$0xff]
  %v1562 = vld [vmem:[%s2 + $0xf8] sm:$0xff]
  %s1563 = scalar_lea.vmem %s1, 80
  %v1564 = vld [vmem:[%s1563] sm:$0xff]
  %v1565 = vld [vmem:[%s1563 + $0x8] sm:$0xff]
  %v1566 = vunpack.c.l.bf16 %v1564
  %v1567 = vunpack.c.h.bf16 %v1564
  %v1568 = vunpack.c.l.bf16 %v1565
  %v1569 = vunpack.c.h.bf16 %v1565
  %v1602 = vunpack.c.l.b16 %v1531
  %v1603 = vunpack.c.h.b16 %v1531
  %v1604 = vunpack.c.l.b16 %v1532
  %v1605 = vunpack.c.h.b16 %v1532
  %v1606 = vunpack.c.l.b16 %v1533
  %v1607 = vunpack.c.h.b16 %v1533
  %v1608 = vunpack.c.l.b16 %v1534
  %v1609 = vunpack.c.h.b16 %v1534
  %v1610 = vunpack.c.l.b16 %v1535
  %v1611 = vunpack.c.h.b16 %v1535
  %v1612 = vunpack.c.l.b16 %v1536
  %v1613 = vunpack.c.h.b16 %v1536
  %v1614 = vunpack.c.l.b16 %v1537
  %v1615 = vunpack.c.h.b16 %v1537
  %v1616 = vunpack.c.l.b16 %v1538
  %v1617 = vunpack.c.h.b16 %v1538
  %v1618 = vunpack.c.l.b16 %v1539
  %v1619 = vunpack.c.h.b16 %v1539
  %v1620 = vunpack.c.l.b16 %v1540
  %v1621 = vunpack.c.h.b16 %v1540
  %v1622 = vunpack.c.l.b16 %v1541
  %v1623 = vunpack.c.h.b16 %v1541
  %v1624 = vunpack.c.l.b16 %v1542
  %v1625 = vunpack.c.h.b16 %v1542
  %v1626 = vunpack.c.l.b16 %v1543
  %v1627 = vunpack.c.h.b16 %v1543
  %v1628 = vunpack.c.l.b16 %v1544
  %v1629 = vunpack.c.h.b16 %v1544
  %v1630 = vunpack.c.l.b16 %v1545
  %v1631 = vunpack.c.h.b16 %v1545
  %v1632 = vunpack.c.l.b16 %v1546
  %v1633 = vunpack.c.h.b16 %v1546
  %v1634 = vunpack.c.l.b16 %v1547
  %v1635 = vunpack.c.h.b16 %v1547
  %v1636 = vunpack.c.l.b16 %v1548
  %v1637 = vunpack.c.h.b16 %v1548
  %v1638 = vunpack.c.l.b16 %v1549
  %v1639 = vunpack.c.h.b16 %v1549
  %v1640 = vunpack.c.l.b16 %v1550
  %v1641 = vunpack.c.h.b16 %v1550
  %v1642 = vunpack.c.l.b16 %v1551
  %v1643 = vunpack.c.h.b16 %v1551
  %v1644 = vunpack.c.l.b16 %v1552
  %v1645 = vunpack.c.h.b16 %v1552
  %v1646 = vunpack.c.l.b16 %v1553
  %v1647 = vunpack.c.h.b16 %v1553
  %v1648 = vunpack.c.l.b16 %v1554
  %v1649 = vunpack.c.h.b16 %v1554
  %v1650 = vunpack.c.l.b16 %v1555
  %v1651 = vunpack.c.h.b16 %v1555
  %v1652 = vunpack.c.l.b16 %v1556
  %v1653 = vunpack.c.h.b16 %v1556
  %v1654 = vunpack.c.l.b16 %v1557
  %v1655 = vunpack.c.h.b16 %v1557
  %v1656 = vunpack.c.l.b16 %v1558
  %v1657 = vunpack.c.h.b16 %v1558
  %v1658 = vunpack.c.l.b16 %v1559
  %v1659 = vunpack.c.h.b16 %v1559
  %v1660 = vunpack.c.l.b16 %v1560
  %v1661 = vunpack.c.h.b16 %v1560
  %v1662 = vunpack.c.l.b16 %v1561
  %v1663 = vunpack.c.h.b16 %v1561
  %v1664 = vunpack.c.l.b16 %v1562
  %v1665 = vunpack.c.h.b16 %v1562
  %v1666 = vpack.c.b16 %v1606, %v1602
  %v1667 = vpack.c.b16 %v1607, %v1603
  %v1668 = vpack.c.b16 %v1608, %v1604
  %v1669 = vpack.c.b16 %v1609, %v1605
  %v1670 = vpack.c.b16 %v1614, %v1610
  %v1671 = vpack.c.b16 %v1615, %v1611
  %v1672 = vpack.c.b16 %v1616, %v1612
  %v1673 = vpack.c.b16 %v1617, %v1613
  %v1674 = vpack.c.b16 %v1622, %v1618
  %v1675 = vpack.c.b16 %v1623, %v1619
  %v1676 = vpack.c.b16 %v1624, %v1620
  %v1677 = vpack.c.b16 %v1625, %v1621
  %v1678 = vpack.c.b16 %v1630, %v1626
  %v1679 = vpack.c.b16 %v1631, %v1627
  %v1680 = vpack.c.b16 %v1632, %v1628
  %v1681 = vpack.c.b16 %v1633, %v1629
  %v1682 = vpack.c.b16 %v1638, %v1634
  %v1683 = vpack.c.b16 %v1639, %v1635
  %v1684 = vpack.c.b16 %v1640, %v1636
  %v1685 = vpack.c.b16 %v1641, %v1637
  %v1686 = vpack.c.b16 %v1646, %v1642
  %v1687 = vpack.c.b16 %v1647, %v1643
  %v1688 = vpack.c.b16 %v1648, %v1644
  %v1689 = vpack.c.b16 %v1649, %v1645
  %v1690 = vpack.c.b16 %v1654, %v1650
  %v1691 = vpack.c.b16 %v1655, %v1651
  %v1692 = vpack.c.b16 %v1656, %v1652
  %v1693 = vpack.c.b16 %v1657, %v1653
  %v1694 = vpack.c.b16 %v1662, %v1658
  %v1695 = vpack.c.b16 %v1663, %v1659
  %v1696 = vpack.c.b16 %v1664, %v1660
  %v1697 = vpack.c.b16 %v1665, %v1661
  %1730 = vmatpush.bf16.msra.mxu0 %v1694
  %1731 = vmatpush.bf16.msra.mxu0 %v1690
  %1732 = vmatpush.bf16.msra.mxu0 %v1686
  %1733 = vmatpush.bf16.msra.mxu0 %v1682
  %1734 = vmatpush.bf16.msra.mxu0 %v1678
  %1735 = vmatpush.bf16.msra.mxu0 %v1674
  %1736 = vmatpush.bf16.msra.mxu0 %v1670
  %1737 = vmatpush.bf16.msra.mxu0 %v1666
  %1738 = vmatmul.bf16.gmra.mxu0 %v1530
  %v1739 = vpop.f32.mrf.mxu0
  %v1740 = vadd.f32 %v1566, %v1739
  %v1741 = vpop.f32.mrf.mxu0
  %1742 = vdwg.mxu0
  %1743 = vmatpush.bf16.msra.mxu0 %v1695
  %1744 = vmatpush.bf16.msra.mxu0 %v1691
  %1745 = vmatpush.bf16.msra.mxu0 %v1687
  %1746 = vmatpush.bf16.msra.mxu0 %v1683
  %1747 = vmatpush.bf16.msra.mxu0 %v1679
  %1748 = vmatpush.bf16.msra.mxu0 %v1675
  %1749 = vmatpush.bf16.msra.mxu0 %v1671
  %1750 = vmatpush.bf16.msra.mxu0 %v1667
  %1751 = vmatmul.bf16.gmra.mxu0 %v1530
  %v1752 = vpop.f32.mrf.mxu0
  %v1753 = vadd.f32 %v1567, %v1752
  %v1754 = vpop.f32.mrf.mxu0
  %1755 = vdwg.mxu0
  %1756 = vmatpush.bf16.msra.mxu0 %v1696
  %1757 = vmatpush.bf16.msra.mxu0 %v1692
  %1758 = vmatpush.bf16.msra.mxu0 %v1688
  %1759 = vmatpush.bf16.msra.mxu0 %v1684
  %1760 = vmatpush.bf16.msra.mxu0 %v1680
  %1761 = vmatpush.bf16.msra.mxu0 %v1676
  %1762 = vmatpush.bf16.msra.mxu0 %v1672
  %1763 = vmatpush.bf16.msra.mxu0 %v1668
  %1764 = vmatmul.bf16.gmra.mxu0 %v1530
  %v1765 = vpop.f32.mrf.mxu0
  %v1766 = vadd.f32 %v1568, %v1765
  %v1767 = vpop.f32.mrf.mxu0
  %1768 = vdwg.mxu0
  %1769 = vmatpush.bf16.msra.mxu0 %v1697
  %1770 = vmatpush.bf16.msra.mxu0 %v1693
  %1771 = vmatpush.bf16.msra.mxu0 %v1689
  %1772 = vmatpush.bf16.msra.mxu0 %v1685
  %1773 = vmatpush.bf16.msra.mxu0 %v1681
  %1774 = vmatpush.bf16.msra.mxu0 %v1677
  %1775 = vmatpush.bf16.msra.mxu0 %v1673
  %1776 = vmatpush.bf16.msra.mxu0 %v1669
  %1777 = vmatmul.bf16.gmra.mxu0 %v1530
  %v1778 = vpop.f32.mrf.mxu0
  %v1779 = vadd.f32 %v1569, %v1778
  %v1780 = vpop.f32.mrf.mxu0
  %1781 = vdwg.mxu0
  %v1782 = vtanh.pop %v1740
  %v1783 = vtanh.pop %v1753
  %v1784 = vtanh.pop %v1766
  %v1785 = vtanh.pop %v1779
  %v1786 = vmul.f32 %v1782, 0.5
  %v1787 = vadd.f32 %v1786, 0.5
  %v1788 = vmul.f32 %v1783, 0.5
  %v1789 = vadd.f32 %v1788, 0.5
  %v1790 = vmul.f32 %v1784, 0.5
  %v1791 = vadd.f32 %v1790, 0.5
  %v1792 = vmul.f32 %v1789, %v1505
  %v1793 = vmul.f32 %v1787, %v1785
  %v1794 = vadd.f32 %v1792, %v1793
  %v1795 = vtanh.pop %v1794
  %v1796 = vmul.f32 %v1791, %v1795
  %s1797 = sadd.s32 %s24, 5
  %v1798 = vstv %s1797
  %vm1799 = vcmp.gt.s32.totalorder %v23, %v1798
  %v1800 = vsel %vm1799, 1, 0
  %1801 = vset.pattern.permute.xlu0 0
  %1802 = vperm.xlu0 %1801, %v1800
  %v1803 = vpop.permute.xlu0 %1802
  %vm1804 = vcmp.eq.s32.totalorder %v1803, 1
  %v1805 = vsel %vm1804, %v1796, %v1504
  %v1806 = vsel %vm1804, %v1794, %v1505
  %v1807 = vsel %vm1804, %v1796, 0.0
  %v1809 = vrot.slane %v1807, 1
  %v1810 = vrot.slane %v1807, 2
  %v1811 = vrot.slane %v1807, 3
  %v1812 = vrot.slane %v1807, 4
  %v1813 = vrot.slane %v1807, 5
  %v1814 = vrot.slane %v1807, 6
  %v1815 = vrot.slane %v1807, 7
  %1823 = vst [vmem:[%s3 + $0x5] sm:$0x1] %v1807
  %1824 = vst [vmem:[%s3 + $0xd] sm:$0x1] %v1809
  %1825 = vst [vmem:[%s3 + $0x15] sm:$0x1] %v1810
  %1826 = vst [vmem:[%s3 + $0x1d] sm:$0x1] %v1811
  %1827 = vst [vmem:[%s3 + $0x25] sm:$0x1] %v1812
  %1828 = vst [vmem:[%s3 + $0x2d] sm:$0x1] %v1813
  %1829 = vst [vmem:[%s3 + $0x35] sm:$0x1] %v1814
  %1830 = vst [vmem:[%s3 + $0x3d] sm:$0x1] %v1815
  %v1831 = vpack.c.bf16 %v1805, %v1805
  %v1832 = vld [vmem:[%s2] sm:$0xff]
  %v1833 = vld [vmem:[%s2 + $0x8] sm:$0xff]
  %v1834 = vld [vmem:[%s2 + $0x10] sm:$0xff]
  %v1835 = vld [vmem:[%s2 + $0x18] sm:$0xff]
  %v1836 = vld [vmem:[%s2 + $0x20] sm:$0xff]
  %v1837 = vld [vmem:[%s2 + $0x28] sm:$0xff]
  %v1838 = vld [vmem:[%s2 + $0x30] sm:$0xff]
  %v1839 = vld [vmem:[%s2 + $0x38] sm:$0xff]
  %v1840 = vld [vmem:[%s2 + $0x40] sm:$0xff]
  %v1841 = vld [vmem:[%s2 + $0x48] sm:$0xff]
  %v1842 = vld [vmem:[%s2 + $0x50] sm:$0xff]
  %v1843 = vld [vmem:[%s2 + $0x58] sm:$0xff]
  %v1844 = vld [vmem:[%s2 + $0x60] sm:$0xff]
  %v1845 = vld [vmem:[%s2 + $0x68] sm:$0xff]
  %v1846 = vld [vmem:[%s2 + $0x70] sm:$0xff]
  %v1847 = vld [vmem:[%s2 + $0x78] sm:$0xff]
  %v1848 = vld [vmem:[%s2 + $0x80] sm:$0xff]
  %v1849 = vld [vmem:[%s2 + $0x88] sm:$0xff]
  %v1850 = vld [vmem:[%s2 + $0x90] sm:$0xff]
  %v1851 = vld [vmem:[%s2 + $0x98] sm:$0xff]
  %v1852 = vld [vmem:[%s2 + $0xa0] sm:$0xff]
  %v1853 = vld [vmem:[%s2 + $0xa8] sm:$0xff]
  %v1854 = vld [vmem:[%s2 + $0xb0] sm:$0xff]
  %v1855 = vld [vmem:[%s2 + $0xb8] sm:$0xff]
  %v1856 = vld [vmem:[%s2 + $0xc0] sm:$0xff]
  %v1857 = vld [vmem:[%s2 + $0xc8] sm:$0xff]
  %v1858 = vld [vmem:[%s2 + $0xd0] sm:$0xff]
  %v1859 = vld [vmem:[%s2 + $0xd8] sm:$0xff]
  %v1860 = vld [vmem:[%s2 + $0xe0] sm:$0xff]
  %v1861 = vld [vmem:[%s2 + $0xe8] sm:$0xff]
  %v1862 = vld [vmem:[%s2 + $0xf0] sm:$0xff]
  %v1863 = vld [vmem:[%s2 + $0xf8] sm:$0xff]
  %s1864 = scalar_lea.vmem %s1, 96
  %v1865 = vld [vmem:[%s1864] sm:$0xff]
  %v1866 = vld [vmem:[%s1864 + $0x8] sm:$0xff]
  %v1867 = vunpack.c.l.bf16 %v1865
  %v1868 = vunpack.c.h.bf16 %v1865
  %v1869 = vunpack.c.l.bf16 %v1866
  %v1870 = vunpack.c.h.bf16 %v1866
  %v1903 = vunpack.c.l.b16 %v1832
  %v1904 = vunpack.c.h.b16 %v1832
  %v1905 = vunpack.c.l.b16 %v1833
  %v1906 = vunpack.c.h.b16 %v1833
  %v1907 = vunpack.c.l.b16 %v1834
  %v1908 = vunpack.c.h.b16 %v1834
  %v1909 = vunpack.c.l.b16 %v1835
  %v1910 = vunpack.c.h.b16 %v1835
  %v1911 = vunpack.c.l.b16 %v1836
  %v1912 = vunpack.c.h.b16 %v1836
  %v1913 = vunpack.c.l.b16 %v1837
  %v1914 = vunpack.c.h.b16 %v1837
  %v1915 = vunpack.c.l.b16 %v1838
  %v1916 = vunpack.c.h.b16 %v1838
  %v1917 = vunpack.c.l.b16 %v1839
  %v1918 = vunpack.c.h.b16 %v1839
  %v1919 = vunpack.c.l.b16 %v1840
  %v1920 = vunpack.c.h.b16 %v1840
  %v1921 = vunpack.c.l.b16 %v1841
  %v1922 = vunpack.c.h.b16 %v1841
  %v1923 = vunpack.c.l.b16 %v1842
  %v1924 = vunpack.c.h.b16 %v1842
  %v1925 = vunpack.c.l.b16 %v1843
  %v1926 = vunpack.c.h.b16 %v1843
  %v1927 = vunpack.c.l.b16 %v1844
  %v1928 = vunpack.c.h.b16 %v1844
  %v1929 = vunpack.c.l.b16 %v1845
  %v1930 = vunpack.c.h.b16 %v1845
  %v1931 = vunpack.c.l.b16 %v1846
  %v1932 = vunpack.c.h.b16 %v1846
  %v1933 = vunpack.c.l.b16 %v1847
  %v1934 = vunpack.c.h.b16 %v1847
  %v1935 = vunpack.c.l.b16 %v1848
  %v1936 = vunpack.c.h.b16 %v1848
  %v1937 = vunpack.c.l.b16 %v1849
  %v1938 = vunpack.c.h.b16 %v1849
  %v1939 = vunpack.c.l.b16 %v1850
  %v1940 = vunpack.c.h.b16 %v1850
  %v1941 = vunpack.c.l.b16 %v1851
  %v1942 = vunpack.c.h.b16 %v1851
  %v1943 = vunpack.c.l.b16 %v1852
  %v1944 = vunpack.c.h.b16 %v1852
  %v1945 = vunpack.c.l.b16 %v1853
  %v1946 = vunpack.c.h.b16 %v1853
  %v1947 = vunpack.c.l.b16 %v1854
  %v1948 = vunpack.c.h.b16 %v1854
  %v1949 = vunpack.c.l.b16 %v1855
  %v1950 = vunpack.c.h.b16 %v1855
  %v1951 = vunpack.c.l.b16 %v1856
  %v1952 = vunpack.c.h.b16 %v1856
  %v1953 = vunpack.c.l.b16 %v1857
  %v1954 = vunpack.c.h.b16 %v1857
  %v1955 = vunpack.c.l.b16 %v1858
  %v1956 = vunpack.c.h.b16 %v1858
  %v1957 = vunpack.c.l.b16 %v1859
  %v1958 = vunpack.c.h.b16 %v1859
  %v1959 = vunpack.c.l.b16 %v1860
  %v1960 = vunpack.c.h.b16 %v1860
  %v1961 = vunpack.c.l.b16 %v1861
  %v1962 = vunpack.c.h.b16 %v1861
  %v1963 = vunpack.c.l.b16 %v1862
  %v1964 = vunpack.c.h.b16 %v1862
  %v1965 = vunpack.c.l.b16 %v1863
  %v1966 = vunpack.c.h.b16 %v1863
  %v1967 = vpack.c.b16 %v1907, %v1903
  %v1968 = vpack.c.b16 %v1908, %v1904
  %v1969 = vpack.c.b16 %v1909, %v1905
  %v1970 = vpack.c.b16 %v1910, %v1906
  %v1971 = vpack.c.b16 %v1915, %v1911
  %v1972 = vpack.c.b16 %v1916, %v1912
  %v1973 = vpack.c.b16 %v1917, %v1913
  %v1974 = vpack.c.b16 %v1918, %v1914
  %v1975 = vpack.c.b16 %v1923, %v1919
  %v1976 = vpack.c.b16 %v1924, %v1920
  %v1977 = vpack.c.b16 %v1925, %v1921
  %v1978 = vpack.c.b16 %v1926, %v1922
  %v1979 = vpack.c.b16 %v1931, %v1927
  %v1980 = vpack.c.b16 %v1932, %v1928
  %v1981 = vpack.c.b16 %v1933, %v1929
  %v1982 = vpack.c.b16 %v1934, %v1930
  %v1983 = vpack.c.b16 %v1939, %v1935
  %v1984 = vpack.c.b16 %v1940, %v1936
  %v1985 = vpack.c.b16 %v1941, %v1937
  %v1986 = vpack.c.b16 %v1942, %v1938
  %v1987 = vpack.c.b16 %v1947, %v1943
  %v1988 = vpack.c.b16 %v1948, %v1944
  %v1989 = vpack.c.b16 %v1949, %v1945
  %v1990 = vpack.c.b16 %v1950, %v1946
  %v1991 = vpack.c.b16 %v1955, %v1951
  %v1992 = vpack.c.b16 %v1956, %v1952
  %v1993 = vpack.c.b16 %v1957, %v1953
  %v1994 = vpack.c.b16 %v1958, %v1954
  %v1995 = vpack.c.b16 %v1963, %v1959
  %v1996 = vpack.c.b16 %v1964, %v1960
  %v1997 = vpack.c.b16 %v1965, %v1961
  %v1998 = vpack.c.b16 %v1966, %v1962
  %2031 = vmatpush.bf16.msra.mxu0 %v1995
  %2032 = vmatpush.bf16.msra.mxu0 %v1991
  %2033 = vmatpush.bf16.msra.mxu0 %v1987
  %2034 = vmatpush.bf16.msra.mxu0 %v1983
  %2035 = vmatpush.bf16.msra.mxu0 %v1979
  %2036 = vmatpush.bf16.msra.mxu0 %v1975
  %2037 = vmatpush.bf16.msra.mxu0 %v1971
  %2038 = vmatpush.bf16.msra.mxu0 %v1967
  %2039 = vmatmul.bf16.gmra.mxu0 %v1831
  %v2040 = vpop.f32.mrf.mxu0
  %v2041 = vadd.f32 %v1867, %v2040
  %v2042 = vpop.f32.mrf.mxu0
  %2043 = vdwg.mxu0
  %2044 = vmatpush.bf16.msra.mxu0 %v1996
  %2045 = vmatpush.bf16.msra.mxu0 %v1992
  %2046 = vmatpush.bf16.msra.mxu0 %v1988
  %2047 = vmatpush.bf16.msra.mxu0 %v1984
  %2048 = vmatpush.bf16.msra.mxu0 %v1980
  %2049 = vmatpush.bf16.msra.mxu0 %v1976
  %2050 = vmatpush.bf16.msra.mxu0 %v1972
  %2051 = vmatpush.bf16.msra.mxu0 %v1968
  %2052 = vmatmul.bf16.gmra.mxu0 %v1831
  %v2053 = vpop.f32.mrf.mxu0
  %v2054 = vadd.f32 %v1868, %v2053
  %v2055 = vpop.f32.mrf.mxu0
  %2056 = vdwg.mxu0
  %2057 = vmatpush.bf16.msra.mxu0 %v1997
  %2058 = vmatpush.bf16.msra.mxu0 %v1993
  %2059 = vmatpush.bf16.msra.mxu0 %v1989
  %2060 = vmatpush.bf16.msra.mxu0 %v1985
  %2061 = vmatpush.bf16.msra.mxu0 %v1981
  %2062 = vmatpush.bf16.msra.mxu0 %v1977
  %2063 = vmatpush.bf16.msra.mxu0 %v1973
  %2064 = vmatpush.bf16.msra.mxu0 %v1969
  %2065 = vmatmul.bf16.gmra.mxu0 %v1831
  %v2066 = vpop.f32.mrf.mxu0
  %v2067 = vadd.f32 %v1869, %v2066
  %v2068 = vpop.f32.mrf.mxu0
  %2069 = vdwg.mxu0
  %2070 = vmatpush.bf16.msra.mxu0 %v1998
  %2071 = vmatpush.bf16.msra.mxu0 %v1994
  %2072 = vmatpush.bf16.msra.mxu0 %v1990
  %2073 = vmatpush.bf16.msra.mxu0 %v1986
  %2074 = vmatpush.bf16.msra.mxu0 %v1982
  %2075 = vmatpush.bf16.msra.mxu0 %v1978
  %2076 = vmatpush.bf16.msra.mxu0 %v1974
  %2077 = vmatpush.bf16.msra.mxu0 %v1970
  %2078 = vmatmul.bf16.gmra.mxu0 %v1831
  %v2079 = vpop.f32.mrf.mxu0
  %v2080 = vadd.f32 %v1870, %v2079
  %v2081 = vpop.f32.mrf.mxu0
  %2082 = vdwg.mxu0
  %v2083 = vtanh.pop %v2041
  %v2084 = vtanh.pop %v2054
  %v2085 = vtanh.pop %v2067
  %v2086 = vtanh.pop %v2080
  %v2087 = vmul.f32 %v2083, 0.5
  %v2088 = vadd.f32 %v2087, 0.5
  %v2089 = vmul.f32 %v2084, 0.5
  %v2090 = vadd.f32 %v2089, 0.5
  %v2091 = vmul.f32 %v2085, 0.5
  %v2092 = vadd.f32 %v2091, 0.5
  %v2093 = vmul.f32 %v2090, %v1806
  %v2094 = vmul.f32 %v2088, %v2086
  %v2095 = vadd.f32 %v2093, %v2094
  %v2096 = vtanh.pop %v2095
  %v2097 = vmul.f32 %v2092, %v2096
  %s2098 = sadd.s32 %s24, 6
  %v2099 = vstv %s2098
  %vm2100 = vcmp.gt.s32.totalorder %v23, %v2099
  %v2101 = vsel %vm2100, 1, 0
  %2102 = vset.pattern.permute.xlu0 0
  %2103 = vperm.xlu0 %2102, %v2101
  %v2104 = vpop.permute.xlu0 %2103
  %vm2105 = vcmp.eq.s32.totalorder %v2104, 1
  %v2106 = vsel %vm2105, %v2097, %v1805
  %v2107 = vsel %vm2105, %v2095, %v1806
  %v2108 = vsel %vm2105, %v2097, 0.0
  %v2110 = vrot.slane %v2108, 1
  %v2111 = vrot.slane %v2108, 2
  %v2112 = vrot.slane %v2108, 3
  %v2113 = vrot.slane %v2108, 4
  %v2114 = vrot.slane %v2108, 5
  %v2115 = vrot.slane %v2108, 6
  %v2116 = vrot.slane %v2108, 7
  %2124 = vst [vmem:[%s3 + $0x6] sm:$0x1] %v2108
  %2125 = vst [vmem:[%s3 + $0xe] sm:$0x1] %v2110
  %2126 = vst [vmem:[%s3 + $0x16] sm:$0x1] %v2111
  %2127 = vst [vmem:[%s3 + $0x1e] sm:$0x1] %v2112
  %2128 = vst [vmem:[%s3 + $0x26] sm:$0x1] %v2113
  %2129 = vst [vmem:[%s3 + $0x2e] sm:$0x1] %v2114
  %2130 = vst [vmem:[%s3 + $0x36] sm:$0x1] %v2115
  %2131 = vst [vmem:[%s3 + $0x3e] sm:$0x1] %v2116
  %v2132 = vpack.c.bf16 %v2106, %v2106
  %v2133 = vld [vmem:[%s2] sm:$0xff]
  %v2134 = vld [vmem:[%s2 + $0x8] sm:$0xff]
  %v2135 = vld [vmem:[%s2 + $0x10] sm:$0xff]
  %v2136 = vld [vmem:[%s2 + $0x18] sm:$0xff]
  %v2137 = vld [vmem:[%s2 + $0x20] sm:$0xff]
  %v2138 = vld [vmem:[%s2 + $0x28] sm:$0xff]
  %v2139 = vld [vmem:[%s2 + $0x30] sm:$0xff]
  %v2140 = vld [vmem:[%s2 + $0x38] sm:$0xff]
  %v2141 = vld [vmem:[%s2 + $0x40] sm:$0xff]
  %v2142 = vld [vmem:[%s2 + $0x48] sm:$0xff]
  %v2143 = vld [vmem:[%s2 + $0x50] sm:$0xff]
  %v2144 = vld [vmem:[%s2 + $0x58] sm:$0xff]
  %v2145 = vld [vmem:[%s2 + $0x60] sm:$0xff]
  %v2146 = vld [vmem:[%s2 + $0x68] sm:$0xff]
  %v2147 = vld [vmem:[%s2 + $0x70] sm:$0xff]
  %v2148 = vld [vmem:[%s2 + $0x78] sm:$0xff]
  %v2149 = vld [vmem:[%s2 + $0x80] sm:$0xff]
  %v2150 = vld [vmem:[%s2 + $0x88] sm:$0xff]
  %v2151 = vld [vmem:[%s2 + $0x90] sm:$0xff]
  %v2152 = vld [vmem:[%s2 + $0x98] sm:$0xff]
  %v2153 = vld [vmem:[%s2 + $0xa0] sm:$0xff]
  %v2154 = vld [vmem:[%s2 + $0xa8] sm:$0xff]
  %v2155 = vld [vmem:[%s2 + $0xb0] sm:$0xff]
  %v2156 = vld [vmem:[%s2 + $0xb8] sm:$0xff]
  %v2157 = vld [vmem:[%s2 + $0xc0] sm:$0xff]
  %v2158 = vld [vmem:[%s2 + $0xc8] sm:$0xff]
  %v2159 = vld [vmem:[%s2 + $0xd0] sm:$0xff]
  %v2160 = vld [vmem:[%s2 + $0xd8] sm:$0xff]
  %v2161 = vld [vmem:[%s2 + $0xe0] sm:$0xff]
  %v2162 = vld [vmem:[%s2 + $0xe8] sm:$0xff]
  %v2163 = vld [vmem:[%s2 + $0xf0] sm:$0xff]
  %v2164 = vld [vmem:[%s2 + $0xf8] sm:$0xff]
  %s2165 = scalar_lea.vmem %s1, 112
  %v2166 = vld [vmem:[%s2165] sm:$0xff]
  %v2167 = vld [vmem:[%s2165 + $0x8] sm:$0xff]
  %v2168 = vunpack.c.l.bf16 %v2166
  %v2169 = vunpack.c.h.bf16 %v2166
  %v2170 = vunpack.c.l.bf16 %v2167
  %v2171 = vunpack.c.h.bf16 %v2167
  %v2204 = vunpack.c.l.b16 %v2133
  %v2205 = vunpack.c.h.b16 %v2133
  %v2206 = vunpack.c.l.b16 %v2134
  %v2207 = vunpack.c.h.b16 %v2134
  %v2208 = vunpack.c.l.b16 %v2135
  %v2209 = vunpack.c.h.b16 %v2135
  %v2210 = vunpack.c.l.b16 %v2136
  %v2211 = vunpack.c.h.b16 %v2136
  %v2212 = vunpack.c.l.b16 %v2137
  %v2213 = vunpack.c.h.b16 %v2137
  %v2214 = vunpack.c.l.b16 %v2138
  %v2215 = vunpack.c.h.b16 %v2138
  %v2216 = vunpack.c.l.b16 %v2139
  %v2217 = vunpack.c.h.b16 %v2139
  %v2218 = vunpack.c.l.b16 %v2140
  %v2219 = vunpack.c.h.b16 %v2140
  %v2220 = vunpack.c.l.b16 %v2141
  %v2221 = vunpack.c.h.b16 %v2141
  %v2222 = vunpack.c.l.b16 %v2142
  %v2223 = vunpack.c.h.b16 %v2142
  %v2224 = vunpack.c.l.b16 %v2143
  %v2225 = vunpack.c.h.b16 %v2143
  %v2226 = vunpack.c.l.b16 %v2144
  %v2227 = vunpack.c.h.b16 %v2144
  %v2228 = vunpack.c.l.b16 %v2145
  %v2229 = vunpack.c.h.b16 %v2145
  %v2230 = vunpack.c.l.b16 %v2146
  %v2231 = vunpack.c.h.b16 %v2146
  %v2232 = vunpack.c.l.b16 %v2147
  %v2233 = vunpack.c.h.b16 %v2147
  %v2234 = vunpack.c.l.b16 %v2148
  %v2235 = vunpack.c.h.b16 %v2148
  %v2236 = vunpack.c.l.b16 %v2149
  %v2237 = vunpack.c.h.b16 %v2149
  %v2238 = vunpack.c.l.b16 %v2150
  %v2239 = vunpack.c.h.b16 %v2150
  %v2240 = vunpack.c.l.b16 %v2151
  %v2241 = vunpack.c.h.b16 %v2151
  %v2242 = vunpack.c.l.b16 %v2152
  %v2243 = vunpack.c.h.b16 %v2152
  %v2244 = vunpack.c.l.b16 %v2153
  %v2245 = vunpack.c.h.b16 %v2153
  %v2246 = vunpack.c.l.b16 %v2154
  %v2247 = vunpack.c.h.b16 %v2154
  %v2248 = vunpack.c.l.b16 %v2155
  %v2249 = vunpack.c.h.b16 %v2155
  %v2250 = vunpack.c.l.b16 %v2156
  %v2251 = vunpack.c.h.b16 %v2156
  %v2252 = vunpack.c.l.b16 %v2157
  %v2253 = vunpack.c.h.b16 %v2157
  %v2254 = vunpack.c.l.b16 %v2158
  %v2255 = vunpack.c.h.b16 %v2158
  %v2256 = vunpack.c.l.b16 %v2159
  %v2257 = vunpack.c.h.b16 %v2159
  %v2258 = vunpack.c.l.b16 %v2160
  %v2259 = vunpack.c.h.b16 %v2160
  %v2260 = vunpack.c.l.b16 %v2161
  %v2261 = vunpack.c.h.b16 %v2161
  %v2262 = vunpack.c.l.b16 %v2162
  %v2263 = vunpack.c.h.b16 %v2162
  %v2264 = vunpack.c.l.b16 %v2163
  %v2265 = vunpack.c.h.b16 %v2163
  %v2266 = vunpack.c.l.b16 %v2164
  %v2267 = vunpack.c.h.b16 %v2164
  %v2268 = vpack.c.b16 %v2208, %v2204
  %v2269 = vpack.c.b16 %v2209, %v2205
  %v2270 = vpack.c.b16 %v2210, %v2206
  %v2271 = vpack.c.b16 %v2211, %v2207
  %v2272 = vpack.c.b16 %v2216, %v2212
  %v2273 = vpack.c.b16 %v2217, %v2213
  %v2274 = vpack.c.b16 %v2218, %v2214
  %v2275 = vpack.c.b16 %v2219, %v2215
  %v2276 = vpack.c.b16 %v2224, %v2220
  %v2277 = vpack.c.b16 %v2225, %v2221
  %v2278 = vpack.c.b16 %v2226, %v2222
  %v2279 = vpack.c.b16 %v2227, %v2223
  %v2280 = vpack.c.b16 %v2232, %v2228
  %v2281 = vpack.c.b16 %v2233, %v2229
  %v2282 = vpack.c.b16 %v2234, %v2230
  %v2283 = vpack.c.b16 %v2235, %v2231
  %v2284 = vpack.c.b16 %v2240, %v2236
  %v2285 = vpack.c.b16 %v2241, %v2237
  %v2286 = vpack.c.b16 %v2242, %v2238
  %v2287 = vpack.c.b16 %v2243, %v2239
  %v2288 = vpack.c.b16 %v2248, %v2244
  %v2289 = vpack.c.b16 %v2249, %v2245
  %v2290 = vpack.c.b16 %v2250, %v2246
  %v2291 = vpack.c.b16 %v2251, %v2247
  %v2292 = vpack.c.b16 %v2256, %v2252
  %v2293 = vpack.c.b16 %v2257, %v2253
  %v2294 = vpack.c.b16 %v2258, %v2254
  %v2295 = vpack.c.b16 %v2259, %v2255
  %v2296 = vpack.c.b16 %v2264, %v2260
  %v2297 = vpack.c.b16 %v2265, %v2261
  %v2298 = vpack.c.b16 %v2266, %v2262
  %v2299 = vpack.c.b16 %v2267, %v2263
  %2332 = vmatpush.bf16.msra.mxu0 %v2296
  %2333 = vmatpush.bf16.msra.mxu0 %v2292
  %2334 = vmatpush.bf16.msra.mxu0 %v2288
  %2335 = vmatpush.bf16.msra.mxu0 %v2284
  %2336 = vmatpush.bf16.msra.mxu0 %v2280
  %2337 = vmatpush.bf16.msra.mxu0 %v2276
  %2338 = vmatpush.bf16.msra.mxu0 %v2272
  %2339 = vmatpush.bf16.msra.mxu0 %v2268
  %2340 = vmatmul.bf16.gmra.mxu0 %v2132
  %v2341 = vpop.f32.mrf.mxu0
  %v2342 = vadd.f32 %v2168, %v2341
  %v2343 = vpop.f32.mrf.mxu0
  %2344 = vdwg.mxu0
  %2345 = vmatpush.bf16.msra.mxu0 %v2297
  %2346 = vmatpush.bf16.msra.mxu0 %v2293
  %2347 = vmatpush.bf16.msra.mxu0 %v2289
  %2348 = vmatpush.bf16.msra.mxu0 %v2285
  %2349 = vmatpush.bf16.msra.mxu0 %v2281
  %2350 = vmatpush.bf16.msra.mxu0 %v2277
  %2351 = vmatpush.bf16.msra.mxu0 %v2273
  %2352 = vmatpush.bf16.msra.mxu0 %v2269
  %2353 = vmatmul.bf16.gmra.mxu0 %v2132
  %v2354 = vpop.f32.mrf.mxu0
  %v2355 = vadd.f32 %v2169, %v2354
  %v2356 = vpop.f32.mrf.mxu0
  %2357 = vdwg.mxu0
  %2358 = vmatpush.bf16.msra.mxu0 %v2298
  %2359 = vmatpush.bf16.msra.mxu0 %v2294
  %2360 = vmatpush.bf16.msra.mxu0 %v2290
  %2361 = vmatpush.bf16.msra.mxu0 %v2286
  %2362 = vmatpush.bf16.msra.mxu0 %v2282
  %2363 = vmatpush.bf16.msra.mxu0 %v2278
  %2364 = vmatpush.bf16.msra.mxu0 %v2274
  %2365 = vmatpush.bf16.msra.mxu0 %v2270
  %2366 = vmatmul.bf16.gmra.mxu0 %v2132
  %v2367 = vpop.f32.mrf.mxu0
  %v2368 = vadd.f32 %v2170, %v2367
  %v2369 = vpop.f32.mrf.mxu0
  %2370 = vdwg.mxu0
  %2371 = vmatpush.bf16.msra.mxu0 %v2299
  %2372 = vmatpush.bf16.msra.mxu0 %v2295
  %2373 = vmatpush.bf16.msra.mxu0 %v2291
  %2374 = vmatpush.bf16.msra.mxu0 %v2287
  %2375 = vmatpush.bf16.msra.mxu0 %v2283
  %2376 = vmatpush.bf16.msra.mxu0 %v2279
  %2377 = vmatpush.bf16.msra.mxu0 %v2275
  %2378 = vmatpush.bf16.msra.mxu0 %v2271
  %2379 = vmatmul.bf16.gmra.mxu0 %v2132
  %v2380 = vpop.f32.mrf.mxu0
  %v2381 = vadd.f32 %v2171, %v2380
  %v2382 = vpop.f32.mrf.mxu0
  %2383 = vdwg.mxu0
  %v2384 = vtanh.pop %v2342
  %v2385 = vtanh.pop %v2355
  %v2386 = vtanh.pop %v2368
  %v2387 = vtanh.pop %v2381
  %v2388 = vmul.f32 %v2384, 0.5
  %v2389 = vadd.f32 %v2388, 0.5
  %v2390 = vmul.f32 %v2385, 0.5
  %v2391 = vadd.f32 %v2390, 0.5
  %v2392 = vmul.f32 %v2386, 0.5
  %v2393 = vadd.f32 %v2392, 0.5
  %v2394 = vmul.f32 %v2391, %v2107
  %v2395 = vmul.f32 %v2389, %v2387
  %v2396 = vadd.f32 %v2394, %v2395
  %v2397 = vtanh.pop %v2396
  %v2398 = vmul.f32 %v2393, %v2397
  %s2399 = sadd.s32 %s24, 7
  %v2400 = vstv %s2399
  %vm2401 = vcmp.gt.s32.totalorder %v23, %v2400
  %v2402 = vsel %vm2401, 1, 0
  %2403 = vset.pattern.permute.xlu0 0
  %2404 = vperm.xlu0 %2403, %v2402
  %v2405 = vpop.permute.xlu0 %2404
  %vm2406 = vcmp.eq.s32.totalorder %v2405, 1
  %v2407 = vsel %vm2406, %v2398, %v2106
  %v2408 = vsel %vm2406, %v2396, %v2107
  %v2409 = vsel %vm2406, %v2398, 0.0
  %v2411 = vrot.slane %v2409, 1
  %v2412 = vrot.slane %v2409, 2
  %v2413 = vrot.slane %v2409, 3
  %v2414 = vrot.slane %v2409, 4
  %v2415 = vrot.slane %v2409, 5
  %v2416 = vrot.slane %v2409, 6
  %v2417 = vrot.slane %v2409, 7
  %2425 = vst [vmem:[%s3 + $0x7] sm:$0x1] %v2409
  %2426 = vst [vmem:[%s3 + $0xf] sm:$0x1] %v2411
  %2427 = vst [vmem:[%s3 + $0x17] sm:$0x1] %v2412
  %2428 = vst [vmem:[%s3 + $0x1f] sm:$0x1] %v2413
  %2429 = vst [vmem:[%s3 + $0x27] sm:$0x1] %v2414
  %2430 = vst [vmem:[%s3 + $0x2f] sm:$0x1] %v2415
  %2431 = vst [vmem:[%s3 + $0x37] sm:$0x1] %v2416
  %2432 = vst [vmem:[%s3 + $0x3f] sm:$0x1] %v2417
  %2433 = vst [vmem:[#allocation2] sm:$0xff] %v2407
  %2434 = vst [vmem:[#allocation3] sm:$0xff] %v2408
  %2435 = vst [vmem:[%s4] sm:$0xff] %v2407
  %2436 = vst [vmem:[%s5] sm:$0xff] %v2408
  // Predicated region
  $region18: #{text_lstm_forward.1} parent=0 // pred_check
    _
  $region19: #{text_lstm_forward.1} parent=0 // pred_check_branch
    %2438 = sbr.rel (0) target = $region21
  $region20: #{text_lstm_forward.1} parent=0 // pred_region
    _
  $region21: #{text_lstm_forward.1} parent=0 // pred_fallthru
    _
  // Predicated region
  $region22: #{text_lstm_forward.1} parent=0 // pred_check
    _
  $region23: #{text_lstm_forward.1} parent=0 // pred_check_branch
    %2440 = sbr.rel (0) target = $region25
  $region24: #{text_lstm_forward.1} parent=0 // pred_region
    _
  $region25: #{text_lstm_forward.1} parent=0 // pred_fallthru
    _
  // Predicated region
  $region26: #{text_lstm_forward.1} parent=0 // pred_check
    _
  $region27: #{text_lstm_forward.1} parent=0 // pred_check_branch
    %2442 = sbr.rel (0) target = $region29
  $region28: #{text_lstm_forward.1} parent=0 // pred_region
    _
  $region29: #{text_lstm_forward.1} parent=0 // pred_fallthru
    _
  // Predicated region
  $region30: #{text_lstm_forward.1} parent=0 // pred_check
    _
  $region31: #{text_lstm_forward.1} parent=0 // pred_check_branch
    %2444 = sbr.rel (0) target = $region33
  $region32: #{text_lstm_forward.1} parent=0 // pred_region
    _
  $region33: #{text_lstm_forward.1} parent=0 // pred_fallthru
    _
  // Predicated region
  $region34: #{text_lstm_forward.1} parent=0 // pred_check
    _
  $region35: #{text_lstm_forward.1} parent=0 // pred_check_branch
    %2446 = sbr.rel (0) target = $region37
  $region36: #{text_lstm_forward.1} parent=0 // pred_region
    _
  $region37: #{text_lstm_forward.1} parent=0 // pred_fallthru
    _
  // Predicated region
  $region38: #{text_lstm_forward.1} parent=0 // pred_check
    _
  $region39: #{text_lstm_forward.1} parent=0 // pred_check_branch
    %2448 = sbr.rel (0) target = $region41
  $region40: #{text_lstm_forward.1} parent=0 // pred_region
    _
  $region41: #{text_lstm_forward.1} parent=0 // pred_fallthru
    _

</llo_original>
